<compile_context>
chip_gen: v7x
topology: tpu7x:2x2x1
jax: 0.10.0
libtpu: 0.0.40
codegen_flags: <defaults>
</compile_context>

<pallas_src>
import jax
import jax.numpy as jnp
from jax.experimental import pallas as pl
from jax.experimental.pallas import tpu as pltpu

N_NODES = 16        # nodes per graph
INPUT_DIM = 16      # node feature dim
GATE_HIDDEN = 64    # nn.Linear(input_dim, 64)


def _adaptive_gate_kernel(x_ref, adj_o_ref, adj_r_ref,
                          w1bd_ref, b1_ref, w2bd_ref, expand_ref, b2_ref,
                          out_ref):
    """One block = G graphs, everything lane-dense.

    x_ref      : [G, N*F]   f32  packed node features (graph-major, node-major)
    adj_*_ref  : [G, N*N]   f32  packed adjacency matrices
    w1bd_ref   : [N*F, N*GH] bf16  kron(I_N, W1)  (block-diagonal gate layer 1)
    b1_ref     : [1, N*GH]  f32  b1 tiled per node
    w2bd_ref   : [N*GH, N]  bf16  kron(I_N, W2)  (block-diagonal gate layer 2)
    expand_ref : [N, N*N]   bf16  kron(I_N, ones(1,N)): alpha[node] -> N lanes
    b2_ref     : [1, 1]     f32  SMEM scalar
    out_ref    : [G, N*N]   f32
    """
    x = x_ref[...].astype(jnp.bfloat16)                                  # [G, N*F]

    # Gate MLP in the packed (graph-row, wide-lane) layout -> pure bf16 MXU work.
    h = jnp.maximum(
        jnp.dot(x, w1bd_ref[...], preferred_element_type=jnp.float32)
        + b1_ref[...], 0.0)                                              # [G, N*GH] f32
    logit = (jnp.dot(h.astype(jnp.bfloat16), w2bd_ref[...],
                     preferred_element_type=jnp.float32)
             + b2_ref[0, 0])                                             # [G, N] f32

    # sigmoid via exp (EUP) + approx reciprocal (EUP vrcp) -- off the VALU path.
    alpha = pl.reciprocal(1.0 + jnp.exp(-logit), approx=True)            # [G, N]

    # Broadcast alpha[node i] across that node's N adjacency lanes with one MXU
    # contraction against a 0/1 expansion matrix (no repeat/reshape relayouts).
    alpha_e = jnp.dot(alpha.astype(jnp.bfloat16), expand_ref[...],
                      preferred_element_type=jnp.float32)                # [G, N*N]

    adj_r = adj_r_ref[...]
    out_ref[...] = adj_r + alpha_e * (adj_o_ref[...] - adj_r)            # lane-dense store


def pack_gate_params(params, n_nodes=N_NODES):
    """Build the packed / block-diagonal gate weights ONCE (outside the hot path)."""
    n = n_nodes
    f, gh = params["w1"].shape
    eye = jnp.eye(n, dtype=jnp.float32)
    return {
        "w1_bd": jnp.kron(eye, params["w1"]).astype(jnp.bfloat16),             # [n*f, n*gh]
        "b1_t": jnp.tile(params["b1"].reshape(1, gh), (1, n)).astype(jnp.float32),  # [1, n*gh]
        "w2_bd": jnp.kron(eye, params["w2"]).astype(jnp.bfloat16),             # [n*gh, n]
        "expand": jnp.kron(eye, jnp.ones((1, n), jnp.float32)).astype(jnp.bfloat16),  # [n, n*n]
        "b2": params["b2"].reshape(1, 1).astype(jnp.float32),                  # [1, 1] (SMEM)
    }


def adaptive_gate_forward(adj_orig, adj_recon, node_features, packed,
                          *, graphs_per_block=None):
    """adj_orig, adj_recon: [B, N, N] f32; node_features: [B, N, F] f32."""
    B, n, _ = adj_orig.shape
    f = node_features.shape[-1]
    gh = packed["b1_t"].shape[-1] // n
    G = B if graphs_per_block is None else graphs_per_block
    assert B % G == 0, "batch must be divisible by graphs_per_block (no tail handling)"

    # Input layout plumbing only (pure reshapes; all weight packing is hoisted).
    x_p = node_features.reshape(B, n * f)
    ao_p = adj_orig.reshape(B, n * n)
    ar_p = adj_recon.reshape(B, n * n)

    out_flat = pl.pallas_call(
        _adaptive_gate_kernel,
        out_shape=jax.ShapeDtypeStruct((B, n * n), jnp.float32),
        grid_spec=pltpu.PrefetchScalarGridSpec(
            num_scalar_prefetch=0,
            grid=(B // G,),
            in_specs=[
                pl.BlockSpec((G, n * f), lambda i: (i, 0)),        # node features
                pl.BlockSpec((G, n * n), lambda i: (i, 0)),        # adj_orig
                pl.BlockSpec((G, n * n), lambda i: (i, 0)),        # adj_recon
                pl.BlockSpec((n * f, n * gh), lambda i: (0, 0)),   # W1 block-diag (bf16, resident)
                pl.BlockSpec((1, n * gh), lambda i: (0, 0)),       # b1 tiled (f32)
                pl.BlockSpec((n * gh, n), lambda i: (0, 0)),       # W2 block-diag (bf16)
                pl.BlockSpec((n, n * n), lambda i: (0, 0)),        # expansion matrix (bf16)
                pl.BlockSpec(memory_space=pltpu.MemorySpace.SMEM), # b2 scalar
            ],
            out_specs=pl.BlockSpec((G, n * n), lambda i: (i, 0)),
        ),
        compiler_params=pltpu.CompilerParams(
            dimension_semantics=("parallel",)),                    # megacore sharding on v7x
    )(x_p, ao_p, ar_p,
      packed["w1_bd"], packed["b1_t"], packed["w2_bd"], packed["expand"], packed["b2"])

    return out_flat.reshape(B, n, n)


def init_params(key, input_dim=INPUT_DIM, gate_hidden=GATE_HIDDEN):
    k1, k2, k3, k4 = jax.random.split(key, 4)
    s1 = 1.0 / jnp.sqrt(input_dim)      # nn.Linear default init range
    s2 = 1.0 / jnp.sqrt(gate_hidden)
    return {
        "w1": jax.random.uniform(k1, (input_dim, gate_hidden), jnp.float32, -s1, s1),
        "b1": jax.random.uniform(k2, (gate_hidden,), jnp.float32, -s1, s1),
        "w2": jax.random.uniform(k3, (gate_hidden, 1), jnp.float32, -s2, s2),
        "b2": jax.random.uniform(k4, (1,), jnp.float32, -s2, s2),
    }


if __name__ == "__main__":
    BATCH = 32              # small demo batch; 2 blocks of 16 graphs -> grid=(2,)
    key = jax.random.PRNGKey(0)
    kx, ka, kr, kp = jax.random.split(key, 4)

    node_features = jax.random.normal(kx, (BATCH, N_NODES, INPUT_DIM), jnp.float32)
    adj_orig = (jax.random.uniform(ka, (BATCH, N_NODES, N_NODES)) < 0.2).astype(jnp.float32)
    adj_recon = jax.nn.sigmoid(jax.random.normal(kr, (BATCH, N_NODES, N_NODES), jnp.float32))
    params = init_params(kp)

    packed = pack_gate_params(params)                       # hoisted: packed once, reused per call

    fwd = jax.jit(adaptive_gate_forward, static_argnames=("graphs_per_block",))
    out = fwd(adj_orig, adj_recon, node_features, packed, graphs_per_block=16)
    out = jax.block_until_ready(out)

    # pure-JAX f32 reference (same semantics as the PyTorch module)
    h_ref = jnp.maximum(node_features @ params["w1"] + params["b1"], 0.0)
    alpha_ref = jax.nn.sigmoid(h_ref @ params["w2"] + params["b2"])        # [B, N, 1]
    expect = alpha_ref * adj_orig + (1.0 - alpha_ref) * adj_recon

    assert out.shape == (BATCH, N_NODES, N_NODES) and out.dtype == jnp.float32
    assert bool(jnp.all(jnp.isfinite(out)))
    max_err = float(jnp.max(jnp.abs(out - expect)))
    assert max_err < 2e-2, f"max_err={max_err}"             # bf16 MXU + approx-recip sigmoid
    print("KERNEL_OK")
</pallas_src>

<mosaic_0001>
module attributes {stable_mosaic.version = 11 : i64} {
  func.func @_adaptive_gate_kernel(%arg0: i32, %arg1: memref<16x256xf32, #tpu.memory_space<vmem>>, %arg2: memref<16x256xf32, #tpu.memory_space<vmem>>, %arg3: memref<16x256xf32, #tpu.memory_space<vmem>>, %arg4: memref<256x1024xbf16, #tpu.memory_space<vmem>>, %arg5: memref<1x1024xf32, #tpu.memory_space<vmem>>, %arg6: memref<1024x16xbf16, #tpu.memory_space<vmem>>, %arg7: memref<16x256xbf16, #tpu.memory_space<vmem>>, %arg8: memref<1x1xf32, #tpu.memory_space<smem>>, %arg9: memref<16x256xf32, #tpu.memory_space<vmem>>) attributes {dimension_semantics = [#tpu.dimension_semantics<parallel>], iteration_bounds = array<i64: 2>, scalar_prefetch = 0 : i64, scratch_operands = 0 : i64, tpu.core_type = #tpu.core_type<tc>, window_params = [{transform_indices = @transform_0, window_bounds = array<i64: 16, 256>}, {transform_indices = @transform_1, window_bounds = array<i64: 16, 256>}, {transform_indices = @transform_2, window_bounds = array<i64: 16, 256>}, {pipeline_mode = #tpu.pipeline_mode<synchronous>, transform_indices = @transform_3, window_bounds = array<i64: 256, 1024>}, {pipeline_mode = #tpu.pipeline_mode<synchronous>, transform_indices = @transform_4, window_bounds = array<i64: 1, 1024>}, {pipeline_mode = #tpu.pipeline_mode<synchronous>, transform_indices = @transform_5, window_bounds = array<i64: 1024, 16>}, {pipeline_mode = #tpu.pipeline_mode<synchronous>, transform_indices = @transform_6, window_bounds = array<i64: 16, 256>}, {transform_indices = @transform_7, window_bounds = array<i64: 1, 1>}, {transform_indices = @transform_8, window_bounds = array<i64: 16, 256>}]} {
    %c0 = arith.constant 0 : index
    %c0_0 = arith.constant 0 : index
    %0 = vector.load %arg1[%c0, %c0_0] : memref<16x256xf32, #tpu.memory_space<vmem>>, vector<16x256xf32>
    %1 = arith.truncf %0 : vector<16x256xf32> to vector<16x256xbf16>
    %c0_1 = arith.constant 0 : index
    %c0_2 = arith.constant 0 : index
    %2 = vector.load %arg4[%c0_1, %c0_2] : memref<256x1024xbf16, #tpu.memory_space<vmem>>, vector<256x1024xbf16>
    %cst = arith.constant dense<0.000000e+00> : vector<16x1024xf32>
    %3 = tpu.matmul %1, %2, %cst {dimension_numbers = #tpu.dot_dimension_numbers<[1], [0], [0], [1], [0, 0, 1, 1], [], []>} : vector<16x256xbf16>, vector<256x1024xbf16>, vector<16x1024xf32> -> vector<16x1024xf32>
    %c0_3 = arith.constant 0 : index
    %c0_4 = arith.constant 0 : index
    %4 = vector.load %arg5[%c0_3, %c0_4] : memref<1x1024xf32, #tpu.memory_space<vmem>>, vector<1x1024xf32>
    %5 = vector.broadcast %4 : vector<1x1024xf32> to vector<16x1024xf32>
    %6 = arith.addf %3, %5 : vector<16x1024xf32>
    %cst_5 = arith.constant 0.000000e+00 : f32
    %7 = vector.broadcast %cst_5 : f32 to vector<16x1024xf32>
    %8 = arith.maximumf %6, %7 : vector<16x1024xf32>
    %9 = arith.truncf %8 : vector<16x1024xf32> to vector<16x1024xbf16>
    %c0_6 = arith.constant 0 : index
    %c0_7 = arith.constant 0 : index
    %10 = vector.load %arg6[%c0_6, %c0_7] : memref<1024x16xbf16, #tpu.memory_space<vmem>>, vector<1024x16xbf16>
    %cst_8 = arith.constant dense<0.000000e+00> : vector<16x16xf32>
    %11 = tpu.matmul %9, %10, %cst_8 {dimension_numbers = #tpu.dot_dimension_numbers<[1], [0], [0], [1], [0, 0, 1, 1], [], []>} : vector<16x1024xbf16>, vector<1024x16xbf16>, vector<16x16xf32> -> vector<16x16xf32>
    %c0_9 = arith.constant 0 : index
    %c0_10 = arith.constant 0 : index
    %12 = memref.load %arg8[%c0_9, %c0_10] : memref<1x1xf32, #tpu.memory_space<smem>>
    %13 = vector.broadcast %12 : f32 to vector<16x16xf32>
    %14 = arith.addf %11, %13 : vector<16x16xf32>
    %cst_11 = arith.constant 0.000000e+00 : f32
    %15 = vector.broadcast %cst_11 : f32 to vector<16x16xf32>
    %16 = arith.subf %15, %14 : vector<16x16xf32>
    %17 = math.exp %16 : vector<16x16xf32>
    %cst_12 = arith.constant 1.000000e+00 : f32
    %18 = vector.broadcast %cst_12 : f32 to vector<16x16xf32>
    %19 = arith.addf %18, %17 : vector<16x16xf32>
    %20 = tpu.reciprocal %19 {approx = true} : vector<16x16xf32> -> vector<16x16xf32>
    %21 = arith.truncf %20 : vector<16x16xf32> to vector<16x16xbf16>
    %c0_13 = arith.constant 0 : index
    %c0_14 = arith.constant 0 : index
    %22 = vector.load %arg7[%c0_13, %c0_14] : memref<16x256xbf16, #tpu.memory_space<vmem>>, vector<16x256xbf16>
    %cst_15 = arith.constant dense<0.000000e+00> : vector<16x256xf32>
    %23 = tpu.matmul %21, %22, %cst_15 {dimension_numbers = #tpu.dot_dimension_numbers<[1], [0], [0], [1], [0, 0, 1, 1], [], []>} : vector<16x16xbf16>, vector<16x256xbf16>, vector<16x256xf32> -> vector<16x256xf32>
    %c0_16 = arith.constant 0 : index
    %c0_17 = arith.constant 0 : index
    %24 = vector.load %arg3[%c0_16, %c0_17] : memref<16x256xf32, #tpu.memory_space<vmem>>, vector<16x256xf32>
    %c0_18 = arith.constant 0 : index
    %c0_19 = arith.constant 0 : index
    %25 = vector.load %arg2[%c0_18, %c0_19] : memref<16x256xf32, #tpu.memory_space<vmem>>, vector<16x256xf32>
    %26 = arith.subf %25, %24 : vector<16x256xf32>
    %27 = arith.mulf %23, %26 : vector<16x256xf32>
    %28 = arith.addf %24, %27 : vector<16x256xf32>
    %c0_20 = arith.constant 0 : index
    %c0_21 = arith.constant 0 : index
    %29 = vector.load %arg9[%c0_20, %c0_21] : memref<16x256xf32, #tpu.memory_space<vmem>>, vector<16x256xf32>
    tpu.vector_store %arg9[%c0_20, %c0_21], %28 {strides = array<i32>} : memref<16x256xf32, #tpu.memory_space<vmem>>, vector<16x256xf32>,
    return
  }
  func.func @transform_0(%arg0: i32) -> (i32, i32) {
    %c0_i32 = arith.constant 0 : i32
    %c0_i32_0 = arith.constant 0 : i32
    return %arg0, %c0_i32 : i32, i32
  }
  func.func @transform_1(%arg0: i32) -> (i32, i32) {
    %c0_i32 = arith.constant 0 : i32
    %c0_i32_0 = arith.constant 0 : i32
    return %arg0, %c0_i32 : i32, i32
  }
  func.func @transform_2(%arg0: i32) -> (i32, i32) {
    %c0_i32 = arith.constant 0 : i32
    %c0_i32_0 = arith.constant 0 : i32
    return %arg0, %c0_i32 : i32, i32
  }
  func.func @transform_3(%arg0: i32) -> (i32, i32) {
    %c0_i32 = arith.constant 0 : i32
    %c0_i32_0 = arith.constant 0 : i32
    %c0_i32_1 = arith.constant 0 : i32
    return %c0_i32, %c0_i32_0 : i32, i32
  }
  func.func @transform_4(%arg0: i32) -> (i32, i32) {
    %c0_i32 = arith.constant 0 : i32
    %c0_i32_0 = arith.constant 0 : i32
    %c0_i32_1 = arith.constant 0 : i32
    return %c0_i32, %c0_i32_0 : i32, i32
  }
  func.func @transform_5(%arg0: i32) -> (i32, i32) {
    %c0_i32 = arith.constant 0 : i32
    %c0_i32_0 = arith.constant 0 : i32
    %c0_i32_1 = arith.constant 0 : i32
    return %c0_i32, %c0_i32_0 : i32, i32
  }
  func.func @transform_6(%arg0: i32) -> (i32, i32) {
    %c0_i32 = arith.constant 0 : i32
    %c0_i32_0 = arith.constant 0 : i32
    %c0_i32_1 = arith.constant 0 : i32
    return %c0_i32, %c0_i32_0 : i32, i32
  }
  func.func @transform_7(%arg0: i32) -> (i32, i32) {
    %c0_i32 = arith.constant 0 : i32
    %c0_i32_0 = arith.constant 0 : i32
    %c0_i32_1 = arith.constant 0 : i32
    return %c0_i32, %c0_i32_0 : i32, i32
  }
  func.func @transform_8(%arg0: i32) -> (i32, i32) {
    %c0_i32 = arith.constant 0 : i32
    %c0_i32_0 = arith.constant 0 : i32
    return %arg0, %c0_i32 : i32, i32
  }
}

</mosaic_0001>

<llo_original>
// kernel: adaptive_gate_forward.1
$region0: #{adaptive_gate_forward.1}
  #allocation0 [shape = 'u32[]', space=smem, size = 0x4, offset = 0x4, fixed_abs, tag = 'smem constant byte address 0x4 - core index']
  #allocation1 [shape = 'u32[144,128]{1,0:T(1,128)}', space=vmem, size = 0x12000, scoped, tag = 'internal scratch']
  #allocation2 [shape = 'f32[1,1]{1,0:T(1,128)S(6)}', space=smem, size = 0x200, scoped, tag = 'scoped memory for adaptive_gate_forward.1']
  %s0 = inlined_call_operand.vmem [shape: f32[32,256], index: 0, kind: input, shape index: {}]
  %s1 = inlined_call_operand.vmem [shape: f32[32,256], index: 1, kind: input, shape index: {}]
  %s2 = inlined_call_operand.vmem [shape: f32[32,256], index: 2, kind: input, shape index: {}]
  %s3 = inlined_call_operand.vmem [shape: bf16[256,1024], index: 3, kind: input, shape index: {}]
  %s4 = inlined_call_operand.vmem [shape: f32[1,1024], index: 4, kind: input, shape index: {}]
  %s5 = inlined_call_operand.vmem [shape: bf16[1024,16], index: 5, kind: input, shape index: {}]
  %s6 = inlined_call_operand.vmem [shape: bf16[16,256], index: 6, kind: input, shape index: {}]
  %s7 = inlined_call_operand.<no memory space> [shape: f32[1,1], index: 7, kind: input, shape index: {}]
  %s8 = inlined_call_operand.vmem [shape: f32[32,256], index: 8, kind: output, shape index: {}]
  %s9 = sld [smem:[#allocation0]]
  $region65: #{adaptive_gate_forward.1} parent=0
    _
  %s11 = ssub.s32 1, %s9
  %s12 = scalar_select 0, %s11, %s9
  %13 = sst [smem:[#allocation2]] %s7
  loop: start=0, step=1, limit=4
  $region2: #{adaptive_gate_forward.1} parent=0 // loop_pre_header
    _
  $region3: #{adaptive_gate_forward.1} parent=0 // loop_header
    %s15 = sphi 0, %s19
    %p16 = scmp.ge.s32.totalorder %s15, 4
    %s25 = sphi 0, %s27
    %s28 = sphi 0, %s25
    %s29 = sphi 0, %s28
    %s45 = sphi 0, %s29
    %s51 = sphi 0, %s53
    %s54 = sphi 0, %s51
    %s55 = sphi 0, %s54
    %s71 = sphi 0, %s55
    %s77 = sphi 0, %s79
    %s80 = sphi 0, %s77
    %s81 = sphi 0, %s80
    %s97 = sphi 0, %s81
    %s101 = sphi 0, %s101
    %s103 = sphi 0, %s101
    %s104 = sphi 0, %s103
    %s118 = sphi 0, %s104
    %s122 = sphi 0, %s122
    %s124 = sphi 0, %s122
    %s125 = sphi 0, %s124
    %s139 = sphi 0, %s125
    %s143 = sphi 0, %s143
    %s145 = sphi 0, %s143
    %s146 = sphi 0, %s145
    %s160 = sphi 0, %s146
    %s164 = sphi 0, %s164
    %s166 = sphi 0, %s164
    %s167 = sphi 0, %s166
    %s181 = sphi 0, %s167
    %s185 = sphi 0, %s185
    %s187 = sphi 0, %s185
    %s188 = sphi 0, %s187
    %s202 = sphi 0, %s188
    %s208 = sphi 0, %s210
    %s211 = sphi 0, %s208
    %s212 = sphi 0, %s211
    %s228 = sphi 0, %s212
  $region4: #{adaptive_gate_forward.1} parent=0 // loop_header_branch
    %18 = sbr.rel (%p16) target = $region8
  $region5: #{adaptive_gate_forward.1} parent=0 // loop_body
    %s20 = ssub.s32 %s15, 1
    %s21 = ssub.s32 %s15, 2
    %s22 = sadd.s32 %s15, 1
    %s23 = ssub.s32 %s15, %s22
    %p24 = scmp.eq.s32.totalorder %s23, 0
    %s26 = sadd.s32 %s25, 1
    %s27 = scalar_select %p24, %s25, %s26
    %p30 = pneg %p24
    %p31 = scmp.eq.s32.totalorder %s15, 1
    %p32 = por %p30, %p31
    %p33 = scmp.ne.s32.totalorder %s25, %s28
    %p34 = scmp.eq.s32.totalorder %s15, 0
    %p35 = por %p33, %p34
    %p36 = scmp.ne.s32.totalorder %s25, %s28
    %p37 = scmp.eq.s32.totalorder %s20, 1
    %p38 = por %p36, %p37
    %p39 = scmp.ne.s32.totalorder %s28, %s29
    %p40 = scmp.eq.s32.totalorder %s20, 0
    %p41 = por %p39, %p40
    %p42 = scmp.ne.s32.totalorder %s28, %s29
    %p43 = scmp.eq.s32.totalorder %s21, 1
    %p44 = por %p42, %p43
    %p46 = scmp.ne.s32.totalorder %s29, %s45
    %p47 = scmp.eq.s32.totalorder %s21, 0
    %p48 = por %p46, %p47
    %s49 = ssub.s32 %s15, %s22
    %p50 = scmp.eq.s32.totalorder %s49, 0
    %s52 = sadd.s32 %s51, 1
    %s53 = scalar_select %p50, %s51, %s52
    %p56 = pneg %p50
    %p57 = scmp.eq.s32.totalorder %s15, 1
    %p58 = por %p56, %p57
    %p59 = scmp.ne.s32.totalorder %s51, %s54
    %p60 = scmp.eq.s32.totalorder %s15, 0
    %p61 = por %p59, %p60
    %p62 = scmp.ne.s32.totalorder %s51, %s54
    %p63 = scmp.eq.s32.totalorder %s20, 1
    %p64 = por %p62, %p63
    %p65 = scmp.ne.s32.totalorder %s54, %s55
    %p66 = scmp.eq.s32.totalorder %s20, 0
    %p67 = por %p65, %p66
    %p68 = scmp.ne.s32.totalorder %s54, %s55
    %p69 = scmp.eq.s32.totalorder %s21, 1
    %p70 = por %p68, %p69
    %p72 = scmp.ne.s32.totalorder %s55, %s71
    %p73 = scmp.eq.s32.totalorder %s21, 0
    %p74 = por %p72, %p73
    %s75 = ssub.s32 %s15, %s22
    %p76 = scmp.eq.s32.totalorder %s75, 0
    %s78 = sadd.s32 %s77, 1
    %s79 = scalar_select %p76, %s77, %s78
    %p82 = pneg %p76
    %p83 = scmp.eq.s32.totalorder %s15, 1
    %p84 = por %p82, %p83
    %p85 = scmp.ne.s32.totalorder %s77, %s80
    %p86 = scmp.eq.s32.totalorder %s15, 0
    %p87 = por %p85, %p86
    %p88 = scmp.ne.s32.totalorder %s77, %s80
    %p89 = scmp.eq.s32.totalorder %s20, 1
    %p90 = por %p88, %p89
    %p91 = scmp.ne.s32.totalorder %s80, %s81
    %p92 = scmp.eq.s32.totalorder %s20, 0
    %p93 = por %p91, %p92
    %p94 = scmp.ne.s32.totalorder %s80, %s81
    %p95 = scmp.eq.s32.totalorder %s21, 1
    %p96 = por %p94, %p95
    %p98 = scmp.ne.s32.totalorder %s81, %s97
    %p99 = scmp.eq.s32.totalorder %s21, 0
    %p100 = por %p98, %p99
    %s102 = sadd.s32 %s101, 1
    %p105 = scmp.eq.s32.totalorder %s15, 1
    %p106 = scmp.ne.s32.totalorder %s101, %s103
    %p107 = scmp.eq.s32.totalorder %s15, 0
    %p108 = por %p106, %p107
    %p109 = scmp.ne.s32.totalorder %s101, %s103
    %p110 = scmp.eq.s32.totalorder %s20, 1
    %p111 = por %p109, %p110
    %p112 = scmp.ne.s32.totalorder %s103, %s104
    %p113 = scmp.eq.s32.totalorder %s20, 0
    %p114 = por %p112, %p113
    %p115 = scmp.ne.s32.totalorder %s103, %s104
    %p116 = scmp.eq.s32.totalorder %s21, 1
    %p117 = por %p115, %p116
    %p119 = scmp.ne.s32.totalorder %s104, %s118
    %p120 = scmp.eq.s32.totalorder %s21, 0
    %p121 = por %p119, %p120
    %s123 = sadd.s32 %s122, 1
    %p126 = scmp.eq.s32.totalorder %s15, 1
    %p127 = scmp.ne.s32.totalorder %s122, %s124
    %p128 = scmp.eq.s32.totalorder %s15, 0
    %p129 = por %p127, %p128
    %p130 = scmp.ne.s32.totalorder %s122, %s124
    %p131 = scmp.eq.s32.totalorder %s20, 1
    %p132 = por %p130, %p131
    %p133 = scmp.ne.s32.totalorder %s124, %s125
    %p134 = scmp.eq.s32.totalorder %s20, 0
    %p135 = por %p133, %p134
    %p136 = scmp.ne.s32.totalorder %s124, %s125
    %p137 = scmp.eq.s32.totalorder %s21, 1
    %p138 = por %p136, %p137
    %p140 = scmp.ne.s32.totalorder %s125, %s139
    %p141 = scmp.eq.s32.totalorder %s21, 0
    %p142 = por %p140, %p141
    %s144 = sadd.s32 %s143, 1
    %p147 = scmp.eq.s32.totalorder %s15, 1
    %p148 = scmp.ne.s32.totalorder %s143, %s145
    %p149 = scmp.eq.s32.totalorder %s15, 0
    %p150 = por %p148, %p149
    %p151 = scmp.ne.s32.totalorder %s143, %s145
    %p152 = scmp.eq.s32.totalorder %s20, 1
    %p153 = por %p151, %p152
    %p154 = scmp.ne.s32.totalorder %s145, %s146
    %p155 = scmp.eq.s32.totalorder %s20, 0
    %p156 = por %p154, %p155
    %p157 = scmp.ne.s32.totalorder %s145, %s146
    %p158 = scmp.eq.s32.totalorder %s21, 1
    %p159 = por %p157, %p158
    %p161 = scmp.ne.s32.totalorder %s146, %s160
    %p162 = scmp.eq.s32.totalorder %s21, 0
    %p163 = por %p161, %p162
    %s165 = sadd.s32 %s164, 1
    %p168 = scmp.eq.s32.totalorder %s15, 1
    %p169 = scmp.ne.s32.totalorder %s164, %s166
    %p170 = scmp.eq.s32.totalorder %s15, 0
    %p171 = por %p169, %p170
    %p172 = scmp.ne.s32.totalorder %s164, %s166
    %p173 = scmp.eq.s32.totalorder %s20, 1
    %p174 = por %p172, %p173
    %p175 = scmp.ne.s32.totalorder %s166, %s167
    %p176 = scmp.eq.s32.totalorder %s20, 0
    %p177 = por %p175, %p176
    %p178 = scmp.ne.s32.totalorder %s166, %s167
    %p179 = scmp.eq.s32.totalorder %s21, 1
    %p180 = por %p178, %p179
    %p182 = scmp.ne.s32.totalorder %s167, %s181
    %p183 = scmp.eq.s32.totalorder %s21, 0
    %p184 = por %p182, %p183
    %s186 = sadd.s32 %s185, 1
    %p189 = scmp.eq.s32.totalorder %s15, 1
    %p190 = scmp.ne.s32.totalorder %s185, %s187
    %p191 = scmp.eq.s32.totalorder %s15, 0
    %p192 = por %p190, %p191
    %p193 = scmp.ne.s32.totalorder %s185, %s187
    %p194 = scmp.eq.s32.totalorder %s20, 1
    %p195 = por %p193, %p194
    %p196 = scmp.ne.s32.totalorder %s187, %s188
    %p197 = scmp.eq.s32.totalorder %s20, 0
    %p198 = por %p196, %p197
    %p199 = scmp.ne.s32.totalorder %s187, %s188
    %p200 = scmp.eq.s32.totalorder %s21, 1
    %p201 = por %p199, %p200
    %p203 = scmp.ne.s32.totalorder %s188, %s202
    %p204 = scmp.eq.s32.totalorder %s21, 0
    %p205 = por %p203, %p204
    %s206 = ssub.s32 %s15, %s22
    %p207 = scmp.eq.s32.totalorder %s206, 0
    %s209 = sadd.s32 %s208, 1
    %s210 = scalar_select %p207, %s208, %s209
    %p213 = pneg %p207
    %p214 = scmp.eq.s32.totalorder %s15, 1
    %p215 = por %p213, %p214
    %p216 = scmp.ne.s32.totalorder %s208, %s211
    %p217 = scmp.eq.s32.totalorder %s15, 0
    %p218 = por %p216, %p217
    %p219 = scmp.ne.s32.totalorder %s208, %s211
    %p220 = scmp.eq.s32.totalorder %s20, 1
    %p221 = por %p219, %p220
    %p222 = scmp.ne.s32.totalorder %s211, %s212
    %p223 = scmp.eq.s32.totalorder %s20, 0
    %p224 = por %p222, %p223
    %p225 = scmp.ne.s32.totalorder %s211, %s212
    %p226 = scmp.eq.s32.totalorder %s21, 1
    %p227 = por %p225, %p226
    %p229 = scmp.ne.s32.totalorder %s212, %s228
    %p230 = scmp.eq.s32.totalorder %s21, 0
    %p231 = por %p229, %p230
    %p232 = scmp.le.s32.totalorder 1, %s15
    %p233 = scmp.lt.s32.totalorder %s15, 3
    %p234 = pnand %p232, %p233
    %p235 = pneg %p234
    // Predicated region
    $region9: #{adaptive_gate_forward.1} parent=5 // pred_check
      _
    $region10: #{adaptive_gate_forward.1} parent=5 // pred_check_branch
      %237 = sbr.rel (%p234) target = $region12
    $region11: #{adaptive_gate_forward.1} parent=5 // pred_region
      %s238 = ssub.s32 %s15, 1
      // Predicated region
      $region13: #{adaptive_gate_forward.1} parent=11 // pred_check
        %p239 = pneg %p114
      $region14: #{adaptive_gate_forward.1} parent=11 // pred_check_branch
        %241 = sbr.rel (%p239) target = $region16
      $region15: #{adaptive_gate_forward.1} parent=11 // pred_region
        _
      $region16: #{adaptive_gate_forward.1} parent=11 // pred_fallthru
        _
      // Predicated region
      $region17: #{adaptive_gate_forward.1} parent=11 // pred_check
        %p242 = pneg %p135
      $region18: #{adaptive_gate_forward.1} parent=11 // pred_check_branch
        %244 = sbr.rel (%p242) target = $region20
      $region19: #{adaptive_gate_forward.1} parent=11 // pred_region
        _
      $region20: #{adaptive_gate_forward.1} parent=11 // pred_fallthru
        _
      // Predicated region
      $region21: #{adaptive_gate_forward.1} parent=11 // pred_check
        %p245 = pneg %p156
      $region22: #{adaptive_gate_forward.1} parent=11 // pred_check_branch
        %247 = sbr.rel (%p245) target = $region24
      $region23: #{adaptive_gate_forward.1} parent=11 // pred_region
        _
      $region24: #{adaptive_gate_forward.1} parent=11 // pred_fallthru
        _
      // Predicated region
      $region25: #{adaptive_gate_forward.1} parent=11 // pred_check
        %p248 = pneg %p177
      $region26: #{adaptive_gate_forward.1} parent=11 // pred_check_branch
        %250 = sbr.rel (%p248) target = $region28
      $region27: #{adaptive_gate_forward.1} parent=11 // pred_region
        _
      $region28: #{adaptive_gate_forward.1} parent=11 // pred_fallthru
        _
      // Predicated region
      $region29: #{adaptive_gate_forward.1} parent=11 // pred_check
        %p251 = pneg %p198
      $region30: #{adaptive_gate_forward.1} parent=11 // pred_check_branch
        %253 = sbr.rel (%p251) target = $region32
      $region31: #{adaptive_gate_forward.1} parent=11 // pred_region
        _
      $region32: #{adaptive_gate_forward.1} parent=11 // pred_fallthru
        _
    $region12: #{adaptive_gate_forward.1} parent=5 // pred_fallthru
      _
    %p254 = scmp.lt.s32.totalorder %s15, 2
    // Predicated region
    $region33: #{adaptive_gate_forward.1} parent=5 // pred_check
      %p255 = pneg %p254
    $region34: #{adaptive_gate_forward.1} parent=5 // pred_check_branch
      %257 = sbr.rel (%p255) target = $region36
    $region35: #{adaptive_gate_forward.1} parent=5 // pred_region
      // Predicated region
      $region37: #{adaptive_gate_forward.1} parent=35 // pred_check
        %p258 = pneg %p35
      $region38: #{adaptive_gate_forward.1} parent=35 // pred_check_branch
        %260 = sbr.rel (%p258) target = $region40
      $region39: #{adaptive_gate_forward.1} parent=35 // pred_region
        %s261 = smul.u32 2, %s15
        %p262 = scmp.lt.s32.totalorder %s261, 3
        %s263 = scalar_select %p262, %s261, 3
        %s264 = smul.addr %s263, 2
        %s265 = smul.addr %s264, 8
        %s266 = scalar_lea.vmem %s0, %s265
        %s267 = smul.u32 2, %s15
      $region40: #{adaptive_gate_forward.1} parent=35 // pred_fallthru
        _
      // Predicated region
      $region41: #{adaptive_gate_forward.1} parent=35 // pred_check
        %p268 = pneg %p61
      $region42: #{adaptive_gate_forward.1} parent=35 // pred_check_branch
        %270 = sbr.rel (%p268) target = $region44
      $region43: #{adaptive_gate_forward.1} parent=35 // pred_region
        %s271 = smul.u32 2, %s15
        %p272 = scmp.lt.s32.totalorder %s271, 3
        %s273 = scalar_select %p272, %s271, 3
        %s274 = smul.addr %s273, 2
        %s275 = smul.addr %s274, 8
        %s276 = scalar_lea.vmem %s1, %s275
        %s277 = smul.u32 2, %s15
      $region44: #{adaptive_gate_forward.1} parent=35 // pred_fallthru
        _
      // Predicated region
      $region45: #{adaptive_gate_forward.1} parent=35 // pred_check
        %p278 = pneg %p87
      $region46: #{adaptive_gate_forward.1} parent=35 // pred_check_branch
        %280 = sbr.rel (%p278) target = $region48
      $region47: #{adaptive_gate_forward.1} parent=35 // pred_region
        %s281 = smul.u32 2, %s15
        %p282 = scmp.lt.s32.totalorder %s281, 3
        %s283 = scalar_select %p282, %s281, 3
        %s284 = smul.addr %s283, 2
        %s285 = smul.addr %s284, 8
        %s286 = scalar_lea.vmem %s2, %s285
        %s287 = smul.u32 2, %s15
      $region48: #{adaptive_gate_forward.1} parent=35 // pred_fallthru
        _
    $region36: #{adaptive_gate_forward.1} parent=5 // pred_fallthru
      _
    %p288 = scmp.le.s32.totalorder 1, %s15
    %p289 = scmp.lt.s32.totalorder %s15, 3
    %p290 = pnand %p288, %p289
    %p291 = pneg %p290
    // Predicated region
    $region49: #{adaptive_gate_forward.1} parent=5 // pred_check
      _
    $region50: #{adaptive_gate_forward.1} parent=5 // pred_check_branch
      %293 = sbr.rel (%p290) target = $region52
    $region51: #{adaptive_gate_forward.1} parent=5 // pred_region
      %s294 = ssub.s32 %s15, 1
      %s295 = smul.u32 2, %s20
      %p296 = scmp.lt.s32.totalorder %s295, 3
      %s297 = scalar_select %p296, %s295, 3
      %s298 = smul.addr %s297, 2
      %s299 = smul.addr %s298, 8
      %s300 = scalar_lea.vmem %s0, %s299
      %p301 = pneg %p41
      %p302 = pneg %p38
      %s303 = smul.u32 2, %s20
      %p304 = scmp.lt.s32.totalorder %s303, 3
      %s305 = scalar_select %p304, %s303, 3
      %s306 = smul.addr %s305, 2
      %s307 = smul.addr %s306, 8
      %s308 = scalar_lea.vmem %s1, %s307
      %p309 = pneg %p67
      %p310 = pneg %p64
      %s311 = smul.u32 2, %s20
      %p312 = scmp.lt.s32.totalorder %s311, 3
      %s313 = scalar_select %p312, %s311, 3
      %s314 = smul.addr %s313, 2
      %s315 = smul.addr %s314, 8
      %s316 = scalar_lea.vmem %s2, %s315
      %p317 = pneg %p93
      %p318 = pneg %p90
      %p319 = pneg %p114
      %p320 = pneg %p111
      %p321 = pneg %p135
      %p322 = pneg %p132
      %p323 = pneg %p156
      %p324 = pneg %p153
      %p325 = pneg %p177
      %p326 = pneg %p174
      %p327 = pneg %p198
      %p328 = pneg %p195
      %p329 = pneg %p224
      %p330 = pneg %p221
      %s331 = smul.u32 2, %s20
      %p332 = scmp.lt.s32.totalorder %s331, 3
      %s333 = scalar_select %p332, %s331, 3
      %s334 = smul.addr %s333, 2
      %s335 = smul.addr %s334, 8
      %s336 = scalar_lea.vmem %s8, %s335
      %s337 = smul.u32 2, %s20
      %p338 = scmp.lt.s32.totalorder %s337, 3
      %s339 = scalar_select %p338, %s337, 3
      %s340 = smul.addr %s339, 2
      %s341 = smul.addr %s340, 8
      %s342 = scalar_lea.vmem %s0, %s341
      %s343 = smul.u32 2, %s20
      %s344 = smul.u32 2, %s20
      %p345 = scmp.lt.s32.totalorder %s344, 3
      %s346 = scalar_select %p345, %s344, 3
      %s347 = smul.addr %s346, 2
      %s348 = smul.addr %s347, 8
      %s349 = scalar_lea.vmem %s1, %s348
      %s350 = smul.u32 2, %s20
      %s351 = smul.u32 2, %s20
      %p352 = scmp.lt.s32.totalorder %s351, 3
      %s353 = scalar_select %p352, %s351, 3
      %s354 = smul.addr %s353, 2
      %s355 = smul.addr %s354, 8
      %s356 = scalar_lea.vmem %s2, %s355
      %s357 = smul.u32 2, %s20
      %s358 = smul.u32 2, %s20
      %p359 = scmp.lt.s32.totalorder %s358, 3
      %s360 = scalar_select %p359, %s358, 3
      %s361 = smul.addr %s360, 2
      %s362 = smul.addr %s361, 8
      %s363 = scalar_lea.vmem %s8, %s362
      %s364 = smul.u32 2, %s20
      %v366 = vld [vmem:[%s342] sm:$0xff]
      %v367 = vld [vmem:[%s342 + $0x8] sm:$0xff]
      %v368 = vld [vmem:[%s342 + $0x10] sm:$0xff]
      %v369 = vld [vmem:[%s342 + $0x18] sm:$0xff]
      %v370 = vpack.c.bf16 %v368, %v366
      %v371 = vpack.c.bf16 %v369, %v367
      %v372 = vld [vmem:[%s3] sm:$0xff]
      %v373 = vld [vmem:[%s3 + $0x8] sm:$0xff]
      %v374 = vld [vmem:[%s3 + $0x10] sm:$0xff]
      %v375 = vld [vmem:[%s3 + $0x18] sm:$0xff]
      %v376 = vld [vmem:[%s3 + $0x20] sm:$0xff]
      %v377 = vld [vmem:[%s3 + $0x28] sm:$0xff]
      %v378 = vld [vmem:[%s3 + $0x30] sm:$0xff]
      %v379 = vld [vmem:[%s3 + $0x38] sm:$0xff]
      %v380 = vld [vmem:[%s3 + $0x40] sm:$0xff]
      %v381 = vld [vmem:[%s3 + $0x48] sm:$0xff]
      %v382 = vld [vmem:[%s3 + $0x50] sm:$0xff]
      %v383 = vld [vmem:[%s3 + $0x58] sm:$0xff]
      %v384 = vld [vmem:[%s3 + $0x60] sm:$0xff]
      %v385 = vld [vmem:[%s3 + $0x68] sm:$0xff]
      %v386 = vld [vmem:[%s3 + $0x70] sm:$0xff]
      %v387 = vld [vmem:[%s3 + $0x78] sm:$0xff]
      %v388 = vld [vmem:[%s3 + $0x80] sm:$0xff]
      %v389 = vld [vmem:[%s3 + $0x88] sm:$0xff]
      %v390 = vld [vmem:[%s3 + $0x90] sm:$0xff]
      %v391 = vld [vmem:[%s3 + $0x98] sm:$0xff]
      %v392 = vld [vmem:[%s3 + $0xa0] sm:$0xff]
      %v393 = vld [vmem:[%s3 + $0xa8] sm:$0xff]
      %v394 = vld [vmem:[%s3 + $0xb0] sm:$0xff]
      %v395 = vld [vmem:[%s3 + $0xb8] sm:$0xff]
      %v396 = vld [vmem:[%s3 + $0xc0] sm:$0xff]
      %v397 = vld [vmem:[%s3 + $0xc8] sm:$0xff]
      %v398 = vld [vmem:[%s3 + $0xd0] sm:$0xff]
      %v399 = vld [vmem:[%s3 + $0xd8] sm:$0xff]
      %v400 = vld [vmem:[%s3 + $0xe0] sm:$0xff]
      %v401 = vld [vmem:[%s3 + $0xe8] sm:$0xff]
      %v402 = vld [vmem:[%s3 + $0xf0] sm:$0xff]
      %v403 = vld [vmem:[%s3 + $0xf8] sm:$0xff]
      %v404 = vld [vmem:[%s3 + $0x100] sm:$0xff]
      %v405 = vld [vmem:[%s3 + $0x108] sm:$0xff]
      %v406 = vld [vmem:[%s3 + $0x110] sm:$0xff]
      %v407 = vld [vmem:[%s3 + $0x118] sm:$0xff]
      %v408 = vld [vmem:[%s3 + $0x120] sm:$0xff]
      %v409 = vld [vmem:[%s3 + $0x128] sm:$0xff]
      %v410 = vld [vmem:[%s3 + $0x130] sm:$0xff]
      %v411 = vld [vmem:[%s3 + $0x138] sm:$0xff]
      %v412 = vld [vmem:[%s3 + $0x140] sm:$0xff]
      %v413 = vld [vmem:[%s3 + $0x148] sm:$0xff]
      %v414 = vld [vmem:[%s3 + $0x150] sm:$0xff]
      %v415 = vld [vmem:[%s3 + $0x158] sm:$0xff]
      %v416 = vld [vmem:[%s3 + $0x160] sm:$0xff]
      %v417 = vld [vmem:[%s3 + $0x168] sm:$0xff]
      %v418 = vld [vmem:[%s3 + $0x170] sm:$0xff]
      %v419 = vld [vmem:[%s3 + $0x178] sm:$0xff]
      %v420 = vld [vmem:[%s3 + $0x180] sm:$0xff]
      %v421 = vld [vmem:[%s3 + $0x188] sm:$0xff]
      %v422 = vld [vmem:[%s3 + $0x190] sm:$0xff]
      %v423 = vld [vmem:[%s3 + $0x198] sm:$0xff]
      %v424 = vld [vmem:[%s3 + $0x1a0] sm:$0xff]
      %v425 = vld [vmem:[%s3 + $0x1a8] sm:$0xff]
      %v426 = vld [vmem:[%s3 + $0x1b0] sm:$0xff]
      %v427 = vld [vmem:[%s3 + $0x1b8] sm:$0xff]
      %v428 = vld [vmem:[%s3 + $0x1c0] sm:$0xff]
      %v429 = vld [vmem:[%s3 + $0x1c8] sm:$0xff]
      %v430 = vld [vmem:[%s3 + $0x1d0] sm:$0xff]
      %v431 = vld [vmem:[%s3 + $0x1d8] sm:$0xff]
      %v432 = vld [vmem:[%s3 + $0x1e0] sm:$0xff]
      %v433 = vld [vmem:[%s3 + $0x1e8] sm:$0xff]
      %v434 = vld [vmem:[%s3 + $0x1f0] sm:$0xff]
      %v435 = vld [vmem:[%s3 + $0x1f8] sm:$0xff]
      %v436 = vld [vmem:[%s3 + $0x200] sm:$0xff]
      %v437 = vld [vmem:[%s3 + $0x208] sm:$0xff]
      %v438 = vld [vmem:[%s3 + $0x210] sm:$0xff]
      %v439 = vld [vmem:[%s3 + $0x218] sm:$0xff]
      %v440 = vld [vmem:[%s3 + $0x220] sm:$0xff]
      %v441 = vld [vmem:[%s3 + $0x228] sm:$0xff]
      %v442 = vld [vmem:[%s3 + $0x230] sm:$0xff]
      %v443 = vld [vmem:[%s3 + $0x238] sm:$0xff]
      %v444 = vld [vmem:[%s3 + $0x240] sm:$0xff]
      %v445 = vld [vmem:[%s3 + $0x248] sm:$0xff]
      %v446 = vld [vmem:[%s3 + $0x250] sm:$0xff]
      %v447 = vld [vmem:[%s3 + $0x258] sm:$0xff]
      %v448 = vld [vmem:[%s3 + $0x260] sm:$0xff]
      %v449 = vld [vmem:[%s3 + $0x268] sm:$0xff]
      %v450 = vld [vmem:[%s3 + $0x270] sm:$0xff]
      %v451 = vld [vmem:[%s3 + $0x278] sm:$0xff]
      %v452 = vld [vmem:[%s3 + $0x280] sm:$0xff]
      %v453 = vld [vmem:[%s3 + $0x288] sm:$0xff]
      %v454 = vld [vmem:[%s3 + $0x290] sm:$0xff]
      %v455 = vld [vmem:[%s3 + $0x298] sm:$0xff]
      %v456 = vld [vmem:[%s3 + $0x2a0] sm:$0xff]
      %v457 = vld [vmem:[%s3 + $0x2a8] sm:$0xff]
      %v458 = vld [vmem:[%s3 + $0x2b0] sm:$0xff]
      %v459 = vld [vmem:[%s3 + $0x2b8] sm:$0xff]
      %v460 = vld [vmem:[%s3 + $0x2c0] sm:$0xff]
      %v461 = vld [vmem:[%s3 + $0x2c8] sm:$0xff]
      %v462 = vld [vmem:[%s3 + $0x2d0] sm:$0xff]
      %v463 = vld [vmem:[%s3 + $0x2d8] sm:$0xff]
      %v464 = vld [vmem:[%s3 + $0x2e0] sm:$0xff]
      %v465 = vld [vmem:[%s3 + $0x2e8] sm:$0xff]
      %v466 = vld [vmem:[%s3 + $0x2f0] sm:$0xff]
      %v467 = vld [vmem:[%s3 + $0x2f8] sm:$0xff]
      %v468 = vld [vmem:[%s3 + $0x300] sm:$0xff]
      %v469 = vld [vmem:[%s3 + $0x308] sm:$0xff]
      %v470 = vld [vmem:[%s3 + $0x310] sm:$0xff]
      %v471 = vld [vmem:[%s3 + $0x318] sm:$0xff]
      %v472 = vld [vmem:[%s3 + $0x320] sm:$0xff]
      %v473 = vld [vmem:[%s3 + $0x328] sm:$0xff]
      %v474 = vld [vmem:[%s3 + $0x330] sm:$0xff]
      %v475 = vld [vmem:[%s3 + $0x338] sm:$0xff]
      %v476 = vld [vmem:[%s3 + $0x340] sm:$0xff]
      %v477 = vld [vmem:[%s3 + $0x348] sm:$0xff]
      %v478 = vld [vmem:[%s3 + $0x350] sm:$0xff]
      %v479 = vld [vmem:[%s3 + $0x358] sm:$0xff]
      %v480 = vld [vmem:[%s3 + $0x360] sm:$0xff]
      %v481 = vld [vmem:[%s3 + $0x368] sm:$0xff]
      %v482 = vld [vmem:[%s3 + $0x370] sm:$0xff]
      %v483 = vld [vmem:[%s3 + $0x378] sm:$0xff]
      %v484 = vld [vmem:[%s3 + $0x380] sm:$0xff]
      %v485 = vld [vmem:[%s3 + $0x388] sm:$0xff]
      %v486 = vld [vmem:[%s3 + $0x390] sm:$0xff]
      %v487 = vld [vmem:[%s3 + $0x398] sm:$0xff]
      %v488 = vld [vmem:[%s3 + $0x3a0] sm:$0xff]
      %v489 = vld [vmem:[%s3 + $0x3a8] sm:$0xff]
      %v490 = vld [vmem:[%s3 + $0x3b0] sm:$0xff]
      %v491 = vld [vmem:[%s3 + $0x3b8] sm:$0xff]
      %v492 = vld [vmem:[%s3 + $0x3c0] sm:$0xff]
      %v493 = vld [vmem:[%s3 + $0x3c8] sm:$0xff]
      %v494 = vld [vmem:[%s3 + $0x3d0] sm:$0xff]
      %v495 = vld [vmem:[%s3 + $0x3d8] sm:$0xff]
      %v496 = vld [vmem:[%s3 + $0x3e0] sm:$0xff]
      %v497 = vld [vmem:[%s3 + $0x3e8] sm:$0xff]
      %v498 = vld [vmem:[%s3 + $0x3f0] sm:$0xff]
      %v499 = vld [vmem:[%s3 + $0x3f8] sm:$0xff]
      %v500 = vld [vmem:[%s4] sm:$0xff]
      %v502 = vlaneseq
      %v503 = vshrl.u32 %v502, 7
      %v504 = vsub.s32 0, %v503
      %v505 = vrot.slane %v500, %v504
      %v506 = vlaneseq
      %v507 = vshrl.u32 %v506, 7
      %v508 = vsub.s32 1, %v507
      %v509 = vrot.slane %v500, %v508
      %v510 = vlaneseq
      %v511 = vshrl.u32 %v510, 7
      %v512 = vsub.s32 2, %v511
      %v513 = vrot.slane %v500, %v512
      %v514 = vlaneseq
      %v515 = vshrl.u32 %v514, 7
      %v516 = vsub.s32 3, %v515
      %v517 = vrot.slane %v500, %v516
      %v518 = vlaneseq
      %v519 = vshrl.u32 %v518, 7
      %v520 = vsub.s32 4, %v519
      %v521 = vrot.slane %v500, %v520
      %v522 = vlaneseq
      %v523 = vshrl.u32 %v522, 7
      %v524 = vsub.s32 5, %v523
      %v525 = vrot.slane %v500, %v524
      %v526 = vlaneseq
      %v527 = vshrl.u32 %v526, 7
      %v528 = vsub.s32 6, %v527
      %v529 = vrot.slane %v500, %v528
      %v530 = vlaneseq
      %v531 = vshrl.u32 %v530, 7
      %v532 = vsub.s32 7, %v531
      %v533 = vrot.slane %v500, %v532
      %v670 = vunpack.c.l.b16 %v372
      %v671 = vunpack.c.h.b16 %v372
      %v672 = vunpack.c.l.b16 %v373
      %v673 = vunpack.c.h.b16 %v373
      %v674 = vunpack.c.l.b16 %v374
      %v675 = vunpack.c.h.b16 %v374
      %v676 = vunpack.c.l.b16 %v375
      %v677 = vunpack.c.h.b16 %v375
      %v678 = vunpack.c.l.b16 %v376
      %v679 = vunpack.c.h.b16 %v376
      %v680 = vunpack.c.l.b16 %v377
      %v681 = vunpack.c.h.b16 %v377
      %v682 = vunpack.c.l.b16 %v378
      %v683 = vunpack.c.h.b16 %v378
      %v684 = vunpack.c.l.b16 %v379
      %v685 = vunpack.c.h.b16 %v379
      %v686 = vunpack.c.l.b16 %v380
      %v687 = vunpack.c.h.b16 %v380
      %v688 = vunpack.c.l.b16 %v381
      %v689 = vunpack.c.h.b16 %v381
      %v690 = vunpack.c.l.b16 %v382
      %v691 = vunpack.c.h.b16 %v382
      %v692 = vunpack.c.l.b16 %v383
      %v693 = vunpack.c.h.b16 %v383
      %v694 = vunpack.c.l.b16 %v384
      %v695 = vunpack.c.h.b16 %v384
      %v696 = vunpack.c.l.b16 %v385
      %v697 = vunpack.c.h.b16 %v385
      %v698 = vunpack.c.l.b16 %v386
      %v699 = vunpack.c.h.b16 %v386
      %v700 = vunpack.c.l.b16 %v387
      %v701 = vunpack.c.h.b16 %v387
      %v702 = vunpack.c.l.b16 %v388
      %v703 = vunpack.c.h.b16 %v388
      %v704 = vunpack.c.l.b16 %v389
      %v705 = vunpack.c.h.b16 %v389
      %v706 = vunpack.c.l.b16 %v390
      %v707 = vunpack.c.h.b16 %v390
      %v708 = vunpack.c.l.b16 %v391
      %v709 = vunpack.c.h.b16 %v391
      %v710 = vunpack.c.l.b16 %v392
      %v711 = vunpack.c.h.b16 %v392
      %v712 = vunpack.c.l.b16 %v393
      %v713 = vunpack.c.h.b16 %v393
      %v714 = vunpack.c.l.b16 %v394
      %v715 = vunpack.c.h.b16 %v394
      %v716 = vunpack.c.l.b16 %v395
      %v717 = vunpack.c.h.b16 %v395
      %v718 = vunpack.c.l.b16 %v396
      %v719 = vunpack.c.h.b16 %v396
      %v720 = vunpack.c.l.b16 %v397
      %v721 = vunpack.c.h.b16 %v397
      %v722 = vunpack.c.l.b16 %v398
      %v723 = vunpack.c.h.b16 %v398
      %v724 = vunpack.c.l.b16 %v399
      %v725 = vunpack.c.h.b16 %v399
      %v726 = vunpack.c.l.b16 %v400
      %v727 = vunpack.c.h.b16 %v400
      %v728 = vunpack.c.l.b16 %v401
      %v729 = vunpack.c.h.b16 %v401
      %v730 = vunpack.c.l.b16 %v402
      %v731 = vunpack.c.h.b16 %v402
      %v732 = vunpack.c.l.b16 %v403
      %v733 = vunpack.c.h.b16 %v403
      %v734 = vunpack.c.l.b16 %v404
      %v735 = vunpack.c.h.b16 %v404
      %v736 = vunpack.c.l.b16 %v405
      %v737 = vunpack.c.h.b16 %v405
      %v738 = vunpack.c.l.b16 %v406
      %v739 = vunpack.c.h.b16 %v406
      %v740 = vunpack.c.l.b16 %v407
      %v741 = vunpack.c.h.b16 %v407
      %v742 = vunpack.c.l.b16 %v408
      %v743 = vunpack.c.h.b16 %v408
      %v744 = vunpack.c.l.b16 %v409
      %v745 = vunpack.c.h.b16 %v409
      %v746 = vunpack.c.l.b16 %v410
      %v747 = vunpack.c.h.b16 %v410
      %v748 = vunpack.c.l.b16 %v411
      %v749 = vunpack.c.h.b16 %v411
      %v750 = vunpack.c.l.b16 %v412
      %v751 = vunpack.c.h.b16 %v412
      %v752 = vunpack.c.l.b16 %v413
      %v753 = vunpack.c.h.b16 %v413
      %v754 = vunpack.c.l.b16 %v414
      %v755 = vunpack.c.h.b16 %v414
      %v756 = vunpack.c.l.b16 %v415
      %v757 = vunpack.c.h.b16 %v415
      %v758 = vunpack.c.l.b16 %v416
      %v759 = vunpack.c.h.b16 %v416
      %v760 = vunpack.c.l.b16 %v417
      %v761 = vunpack.c.h.b16 %v417
      %v762 = vunpack.c.l.b16 %v418
      %v763 = vunpack.c.h.b16 %v418
      %v764 = vunpack.c.l.b16 %v419
      %v765 = vunpack.c.h.b16 %v419
      %v766 = vunpack.c.l.b16 %v420
      %v767 = vunpack.c.h.b16 %v420
      %v768 = vunpack.c.l.b16 %v421
      %v769 = vunpack.c.h.b16 %v421
      %v770 = vunpack.c.l.b16 %v422
      %v771 = vunpack.c.h.b16 %v422
      %v772 = vunpack.c.l.b16 %v423
      %v773 = vunpack.c.h.b16 %v423
      %v774 = vunpack.c.l.b16 %v424
      %v775 = vunpack.c.h.b16 %v424
      %v776 = vunpack.c.l.b16 %v425
      %v777 = vunpack.c.h.b16 %v425
      %v778 = vunpack.c.l.b16 %v426
      %v779 = vunpack.c.h.b16 %v426
      %v780 = vunpack.c.l.b16 %v427
      %v781 = vunpack.c.h.b16 %v427
      %v782 = vunpack.c.l.b16 %v428
      %v783 = vunpack.c.h.b16 %v428
      %v784 = vunpack.c.l.b16 %v429
      %v785 = vunpack.c.h.b16 %v429
      %v786 = vunpack.c.l.b16 %v430
      %v787 = vunpack.c.h.b16 %v430
      %v788 = vunpack.c.l.b16 %v431
      %v789 = vunpack.c.h.b16 %v431
      %v790 = vunpack.c.l.b16 %v432
      %v791 = vunpack.c.h.b16 %v432
      %v792 = vunpack.c.l.b16 %v433
      %v793 = vunpack.c.h.b16 %v433
      %v794 = vunpack.c.l.b16 %v434
      %v795 = vunpack.c.h.b16 %v434
      %v796 = vunpack.c.l.b16 %v435
      %v797 = vunpack.c.h.b16 %v435
      %v798 = vunpack.c.l.b16 %v436
      %v799 = vunpack.c.h.b16 %v436
      %v800 = vunpack.c.l.b16 %v437
      %v801 = vunpack.c.h.b16 %v437
      %v802 = vunpack.c.l.b16 %v438
      %v803 = vunpack.c.h.b16 %v438
      %v804 = vunpack.c.l.b16 %v439
      %v805 = vunpack.c.h.b16 %v439
      %v806 = vunpack.c.l.b16 %v440
      %v807 = vunpack.c.h.b16 %v440
      %v808 = vunpack.c.l.b16 %v441
      %v809 = vunpack.c.h.b16 %v441
      %v810 = vunpack.c.l.b16 %v442
      %v811 = vunpack.c.h.b16 %v442
      %v812 = vunpack.c.l.b16 %v443
      %v813 = vunpack.c.h.b16 %v443
      %v814 = vunpack.c.l.b16 %v444
      %v815 = vunpack.c.h.b16 %v444
      %v816 = vunpack.c.l.b16 %v445
      %v817 = vunpack.c.h.b16 %v445
      %v818 = vunpack.c.l.b16 %v446
      %v819 = vunpack.c.h.b16 %v446
      %v820 = vunpack.c.l.b16 %v447
      %v821 = vunpack.c.h.b16 %v447
      %v822 = vunpack.c.l.b16 %v448
      %v823 = vunpack.c.h.b16 %v448
      %v824 = vunpack.c.l.b16 %v449
      %v825 = vunpack.c.h.b16 %v449
      %v826 = vunpack.c.l.b16 %v450
      %v827 = vunpack.c.h.b16 %v450
      %v828 = vunpack.c.l.b16 %v451
      %v829 = vunpack.c.h.b16 %v451
      %v830 = vunpack.c.l.b16 %v452
      %v831 = vunpack.c.h.b16 %v452
      %v832 = vunpack.c.l.b16 %v453
      %v833 = vunpack.c.h.b16 %v453
      %v834 = vunpack.c.l.b16 %v454
      %v835 = vunpack.c.h.b16 %v454
      %v836 = vunpack.c.l.b16 %v455
      %v837 = vunpack.c.h.b16 %v455
      %v838 = vunpack.c.l.b16 %v456
      %v839 = vunpack.c.h.b16 %v456
      %v840 = vunpack.c.l.b16 %v457
      %v841 = vunpack.c.h.b16 %v457
      %v842 = vunpack.c.l.b16 %v458
      %v843 = vunpack.c.h.b16 %v458
      %v844 = vunpack.c.l.b16 %v459
      %v845 = vunpack.c.h.b16 %v459
      %v846 = vunpack.c.l.b16 %v460
      %v847 = vunpack.c.h.b16 %v460
      %v848 = vunpack.c.l.b16 %v461
      %v849 = vunpack.c.h.b16 %v461
      %v850 = vunpack.c.l.b16 %v462
      %v851 = vunpack.c.h.b16 %v462
      %v852 = vunpack.c.l.b16 %v463
      %v853 = vunpack.c.h.b16 %v463
      %v854 = vunpack.c.l.b16 %v464
      %v855 = vunpack.c.h.b16 %v464
      %v856 = vunpack.c.l.b16 %v465
      %v857 = vunpack.c.h.b16 %v465
      %v858 = vunpack.c.l.b16 %v466
      %v859 = vunpack.c.h.b16 %v466
      %v860 = vunpack.c.l.b16 %v467
      %v861 = vunpack.c.h.b16 %v467
      %v862 = vunpack.c.l.b16 %v468
      %v863 = vunpack.c.h.b16 %v468
      %v864 = vunpack.c.l.b16 %v469
      %v865 = vunpack.c.h.b16 %v469
      %v866 = vunpack.c.l.b16 %v470
      %v867 = vunpack.c.h.b16 %v470
      %v868 = vunpack.c.l.b16 %v471
      %v869 = vunpack.c.h.b16 %v471
      %v870 = vunpack.c.l.b16 %v472
      %v871 = vunpack.c.h.b16 %v472
      %v872 = vunpack.c.l.b16 %v473
      %v873 = vunpack.c.h.b16 %v473
      %v874 = vunpack.c.l.b16 %v474
      %v875 = vunpack.c.h.b16 %v474
      %v876 = vunpack.c.l.b16 %v475
      %v877 = vunpack.c.h.b16 %v475
      %v878 = vunpack.c.l.b16 %v476
      %v879 = vunpack.c.h.b16 %v476
      %v880 = vunpack.c.l.b16 %v477
      %v881 = vunpack.c.h.b16 %v477
      %v882 = vunpack.c.l.b16 %v478
      %v883 = vunpack.c.h.b16 %v478
      %v884 = vunpack.c.l.b16 %v479
      %v885 = vunpack.c.h.b16 %v479
      %v886 = vunpack.c.l.b16 %v480
      %v887 = vunpack.c.h.b16 %v480
      %v888 = vunpack.c.l.b16 %v481
      %v889 = vunpack.c.h.b16 %v481
      %v890 = vunpack.c.l.b16 %v482
      %v891 = vunpack.c.h.b16 %v482
      %v892 = vunpack.c.l.b16 %v483
      %v893 = vunpack.c.h.b16 %v483
      %v894 = vunpack.c.l.b16 %v484
      %v895 = vunpack.c.h.b16 %v484
      %v896 = vunpack.c.l.b16 %v485
      %v897 = vunpack.c.h.b16 %v485
      %v898 = vunpack.c.l.b16 %v486
      %v899 = vunpack.c.h.b16 %v486
      %v900 = vunpack.c.l.b16 %v487
      %v901 = vunpack.c.h.b16 %v487
      %v902 = vunpack.c.l.b16 %v488
      %v903 = vunpack.c.h.b16 %v488
      %v904 = vunpack.c.l.b16 %v489
      %v905 = vunpack.c.h.b16 %v489
      %v906 = vunpack.c.l.b16 %v490
      %v907 = vunpack.c.h.b16 %v490
      %v908 = vunpack.c.l.b16 %v491
      %v909 = vunpack.c.h.b16 %v491
      %v910 = vunpack.c.l.b16 %v492
      %v911 = vunpack.c.h.b16 %v492
      %v912 = vunpack.c.l.b16 %v493
      %v913 = vunpack.c.h.b16 %v493
      %v914 = vunpack.c.l.b16 %v494
      %v915 = vunpack.c.h.b16 %v494
      %v916 = vunpack.c.l.b16 %v495
      %v917 = vunpack.c.h.b16 %v495
      %v918 = vunpack.c.l.b16 %v496
      %v919 = vunpack.c.h.b16 %v496
      %v920 = vunpack.c.l.b16 %v497
      %v921 = vunpack.c.h.b16 %v497
      %v922 = vunpack.c.l.b16 %v498
      %v923 = vunpack.c.h.b16 %v498
      %v924 = vunpack.c.l.b16 %v499
      %v925 = vunpack.c.h.b16 %v499
      %v926 = vpack.c.b16 %v678, %v670
      %v927 = vpack.c.b16 %v679, %v671
      %v928 = vpack.c.b16 %v680, %v672
      %v929 = vpack.c.b16 %v681, %v673
      %v930 = vpack.c.b16 %v682, %v674
      %v931 = vpack.c.b16 %v683, %v675
      %v932 = vpack.c.b16 %v684, %v676
      %v933 = vpack.c.b16 %v685, %v677
      %v934 = vpack.c.b16 %v694, %v686
      %v935 = vpack.c.b16 %v695, %v687
      %v936 = vpack.c.b16 %v696, %v688
      %v937 = vpack.c.b16 %v697, %v689
      %v938 = vpack.c.b16 %v698, %v690
      %v939 = vpack.c.b16 %v699, %v691
      %v940 = vpack.c.b16 %v700, %v692
      %v941 = vpack.c.b16 %v701, %v693
      %v942 = vpack.c.b16 %v710, %v702
      %v943 = vpack.c.b16 %v711, %v703
      %v944 = vpack.c.b16 %v712, %v704
      %v945 = vpack.c.b16 %v713, %v705
      %v946 = vpack.c.b16 %v714, %v706
      %v947 = vpack.c.b16 %v715, %v707
      %v948 = vpack.c.b16 %v716, %v708
      %v949 = vpack.c.b16 %v717, %v709
      %v950 = vpack.c.b16 %v726, %v718
      %v951 = vpack.c.b16 %v727, %v719
      %v952 = vpack.c.b16 %v728, %v720
      %v953 = vpack.c.b16 %v729, %v721
      %v954 = vpack.c.b16 %v730, %v722
      %v955 = vpack.c.b16 %v731, %v723
      %v956 = vpack.c.b16 %v732, %v724
      %v957 = vpack.c.b16 %v733, %v725
      %v958 = vpack.c.b16 %v742, %v734
      %v959 = vpack.c.b16 %v743, %v735
      %v960 = vpack.c.b16 %v744, %v736
      %v961 = vpack.c.b16 %v745, %v737
      %v962 = vpack.c.b16 %v746, %v738
      %v963 = vpack.c.b16 %v747, %v739
      %v964 = vpack.c.b16 %v748, %v740
      %v965 = vpack.c.b16 %v749, %v741
      %v966 = vpack.c.b16 %v758, %v750
      %v967 = vpack.c.b16 %v759, %v751
      %v968 = vpack.c.b16 %v760, %v752
      %v969 = vpack.c.b16 %v761, %v753
      %v970 = vpack.c.b16 %v762, %v754
      %v971 = vpack.c.b16 %v763, %v755
      %v972 = vpack.c.b16 %v764, %v756
      %v973 = vpack.c.b16 %v765, %v757
      %v974 = vpack.c.b16 %v774, %v766
      %v975 = vpack.c.b16 %v775, %v767
      %v976 = vpack.c.b16 %v776, %v768
      %v977 = vpack.c.b16 %v777, %v769
      %v978 = vpack.c.b16 %v778, %v770
      %v979 = vpack.c.b16 %v779, %v771
      %v980 = vpack.c.b16 %v780, %v772
      %v981 = vpack.c.b16 %v781, %v773
      %v982 = vpack.c.b16 %v790, %v782
      %v983 = vpack.c.b16 %v791, %v783
      %v984 = vpack.c.b16 %v792, %v784
      %v985 = vpack.c.b16 %v793, %v785
      %v986 = vpack.c.b16 %v794, %v786
      %v987 = vpack.c.b16 %v795, %v787
      %v988 = vpack.c.b16 %v796, %v788
      %v989 = vpack.c.b16 %v797, %v789
      %v990 = vpack.c.b16 %v806, %v798
      %v991 = vpack.c.b16 %v807, %v799
      %v992 = vpack.c.b16 %v808, %v800
      %v993 = vpack.c.b16 %v809, %v801
      %v994 = vpack.c.b16 %v810, %v802
      %v995 = vpack.c.b16 %v811, %v803
      %v996 = vpack.c.b16 %v812, %v804
      %v997 = vpack.c.b16 %v813, %v805
      %v998 = vpack.c.b16 %v822, %v814
      %v999 = vpack.c.b16 %v823, %v815
      %v1000 = vpack.c.b16 %v824, %v816
      %v1001 = vpack.c.b16 %v825, %v817
      %v1002 = vpack.c.b16 %v826, %v818
      %v1003 = vpack.c.b16 %v827, %v819
      %v1004 = vpack.c.b16 %v828, %v820
      %v1005 = vpack.c.b16 %v829, %v821
      %v1006 = vpack.c.b16 %v838, %v830
      %v1007 = vpack.c.b16 %v839, %v831
      %v1008 = vpack.c.b16 %v840, %v832
      %v1009 = vpack.c.b16 %v841, %v833
      %v1010 = vpack.c.b16 %v842, %v834
      %v1011 = vpack.c.b16 %v843, %v835
      %v1012 = vpack.c.b16 %v844, %v836
      %v1013 = vpack.c.b16 %v845, %v837
      %v1014 = vpack.c.b16 %v854, %v846
      %v1015 = vpack.c.b16 %v855, %v847
      %v1016 = vpack.c.b16 %v856, %v848
      %v1017 = vpack.c.b16 %v857, %v849
      %v1018 = vpack.c.b16 %v858, %v850
      %v1019 = vpack.c.b16 %v859, %v851
      %v1020 = vpack.c.b16 %v860, %v852
      %v1021 = vpack.c.b16 %v861, %v853
      %v1022 = vpack.c.b16 %v870, %v862
      %v1023 = vpack.c.b16 %v871, %v863
      %v1024 = vpack.c.b16 %v872, %v864
      %v1025 = vpack.c.b16 %v873, %v865
      %v1026 = vpack.c.b16 %v874, %v866
      %v1027 = vpack.c.b16 %v875, %v867
      %v1028 = vpack.c.b16 %v876, %v868
      %v1029 = vpack.c.b16 %v877, %v869
      %v1030 = vpack.c.b16 %v886, %v878
      %v1031 = vpack.c.b16 %v887, %v879
      %v1032 = vpack.c.b16 %v888, %v880
      %v1033 = vpack.c.b16 %v889, %v881
      %v1034 = vpack.c.b16 %v890, %v882
      %v1035 = vpack.c.b16 %v891, %v883
      %v1036 = vpack.c.b16 %v892, %v884
      %v1037 = vpack.c.b16 %v893, %v885
      %v1038 = vpack.c.b16 %v902, %v894
      %v1039 = vpack.c.b16 %v903, %v895
      %v1040 = vpack.c.b16 %v904, %v896
      %v1041 = vpack.c.b16 %v905, %v897
      %v1042 = vpack.c.b16 %v906, %v898
      %v1043 = vpack.c.b16 %v907, %v899
      %v1044 = vpack.c.b16 %v908, %v900
      %v1045 = vpack.c.b16 %v909, %v901
      %v1046 = vpack.c.b16 %v918, %v910
      %v1047 = vpack.c.b16 %v919, %v911
      %v1048 = vpack.c.b16 %v920, %v912
      %v1049 = vpack.c.b16 %v921, %v913
      %v1050 = vpack.c.b16 %v922, %v914
      %v1051 = vpack.c.b16 %v923, %v915
      %v1052 = vpack.c.b16 %v924, %v916
      %v1053 = vpack.c.b16 %v925, %v917
      %1182 = vmatprep.subr.bf16.mxu0 %v927
      %1183 = vmatpush1.bf16.msra.mxu0 %v926
      %1184 = vmatprep.subr.bf16.mxu0 %v935
      %1185 = vmatpush1.bf16.msra.mxu0 %v934
      %1186 = vmatprep.subr.bf16.mxu0 %v943
      %1187 = vmatpush1.bf16.msra.mxu0 %v942
      %1188 = vmatprep.subr.bf16.mxu0 %v951
      %1189 = vmatpush1.bf16.msra.mxu0 %v950
      %1190 = vmatprep.subr.bf16.mxu0 %v959
      %1191 = vmatpush1.bf16.msra.mxu0 %v958
      %1192 = vmatprep.subr.bf16.mxu0 %v967
      %1193 = vmatpush1.bf16.msra.mxu0 %v966
      %1194 = vmatprep.subr.bf16.mxu0 %v975
      %1195 = vmatpush1.bf16.msra.mxu0 %v974
      %1196 = vmatprep.subr.bf16.mxu0 %v983
      %1197 = vmatpush1.bf16.msra.mxu0 %v982
      %1198 = vmatprep.subr.bf16.mxu0 %v991
      %1199 = vmatpush1.bf16.msra.mxu0 %v990
      %1200 = vmatprep.subr.bf16.mxu0 %v999
      %1201 = vmatpush1.bf16.msra.mxu0 %v998
      %1202 = vmatprep.subr.bf16.mxu0 %v1007
      %1203 = vmatpush1.bf16.msra.mxu0 %v1006
      %1204 = vmatprep.subr.bf16.mxu0 %v1015
      %1205 = vmatpush1.bf16.msra.mxu0 %v1014
      %1206 = vmatprep.subr.bf16.mxu0 %v1023
      %1207 = vmatpush1.bf16.msra.mxu0 %v1022
      %1208 = vmatprep.subr.bf16.mxu0 %v1031
      %1209 = vmatpush1.bf16.msra.mxu0 %v1030
      %1210 = vmatprep.subr.bf16.mxu0 %v1039
      %1211 = vmatpush1.bf16.msra.mxu0 %v1038
      %1212 = vmatprep.subr.bf16.mxu0 %v1047
      %1213 = vmatpush1.bf16.msra.mxu0 %v1046
      %1214 = vmatprep.mubr.bf16.mxu0 %v371
      %1215 = vmatmul.mubr.bf16.gmra.mrb[0].mxu0 %v370
      %v1216 = vpop.f32.mrb[0].mxu0
      %v1217 = vadd.f32 %v505, %v1216
      %v1218 = vpop.f32.mrb[0].mxu0
      %v1219 = vadd.f32 %v509, %v1218
      %v1220 = vpop.f32.mrb[0].mxu0
      %v1221 = vadd.f32 %v505, %v1220
      %v1222 = vpop.f32.mrb[0].mxu0
      %v1223 = vadd.f32 %v509, %v1222
      %1224 = vdwg.mxu0
      %1225 = vmatprep.subr.bf16.mxu0 %v929
      %1226 = vmatpush1.bf16.msra.mxu0 %v928
      %1227 = vmatprep.subr.bf16.mxu0 %v937
      %1228 = vmatpush1.bf16.msra.mxu0 %v936
      %1229 = vmatprep.subr.bf16.mxu0 %v945
      %1230 = vmatpush1.bf16.msra.mxu0 %v944
      %1231 = vmatprep.subr.bf16.mxu0 %v953
      %1232 = vmatpush1.bf16.msra.mxu0 %v952
      %1233 = vmatprep.subr.bf16.mxu0 %v961
      %1234 = vmatpush1.bf16.msra.mxu0 %v960
      %1235 = vmatprep.subr.bf16.mxu0 %v969
      %1236 = vmatpush1.bf16.msra.mxu0 %v968
      %1237 = vmatprep.subr.bf16.mxu0 %v977
      %1238 = vmatpush1.bf16.msra.mxu0 %v976
      %1239 = vmatprep.subr.bf16.mxu0 %v985
      %1240 = vmatpush1.bf16.msra.mxu0 %v984
      %1241 = vmatprep.subr.bf16.mxu0 %v993
      %1242 = vmatpush1.bf16.msra.mxu0 %v992
      %1243 = vmatprep.subr.bf16.mxu0 %v1001
      %1244 = vmatpush1.bf16.msra.mxu0 %v1000
      %1245 = vmatprep.subr.bf16.mxu0 %v1009
      %1246 = vmatpush1.bf16.msra.mxu0 %v1008
      %1247 = vmatprep.subr.bf16.mxu0 %v1017
      %1248 = vmatpush1.bf16.msra.mxu0 %v1016
      %1249 = vmatprep.subr.bf16.mxu0 %v1025
      %1250 = vmatpush1.bf16.msra.mxu0 %v1024
      %1251 = vmatprep.subr.bf16.mxu0 %v1033
      %1252 = vmatpush1.bf16.msra.mxu0 %v1032
      %1253 = vmatprep.subr.bf16.mxu0 %v1041
      %1254 = vmatpush1.bf16.msra.mxu0 %v1040
      %1255 = vmatprep.subr.bf16.mxu0 %v1049
      %1256 = vmatpush1.bf16.msra.mxu0 %v1048
      %1257 = vmatprep.mubr.bf16.mxu0 %v371
      %1258 = vmatmul.mubr.bf16.gmra.mrb[0].mxu0 %v370
      %v1259 = vpop.f32.mrb[0].mxu0
      %v1260 = vadd.f32 %v513, %v1259
      %v1261 = vpop.f32.mrb[0].mxu0
      %v1262 = vadd.f32 %v517, %v1261
      %v1263 = vpop.f32.mrb[0].mxu0
      %v1264 = vadd.f32 %v513, %v1263
      %v1265 = vpop.f32.mrb[0].mxu0
      %v1266 = vadd.f32 %v517, %v1265
      %1267 = vdwg.mxu0
      %1268 = vmatprep.subr.bf16.mxu0 %v931
      %1269 = vmatpush1.bf16.msra.mxu0 %v930
      %1270 = vmatprep.subr.bf16.mxu0 %v939
      %1271 = vmatpush1.bf16.msra.mxu0 %v938
      %1272 = vmatprep.subr.bf16.mxu0 %v947
      %1273 = vmatpush1.bf16.msra.mxu0 %v946
      %1274 = vmatprep.subr.bf16.mxu0 %v955
      %1275 = vmatpush1.bf16.msra.mxu0 %v954
      %1276 = vmatprep.subr.bf16.mxu0 %v963
      %1277 = vmatpush1.bf16.msra.mxu0 %v962
      %1278 = vmatprep.subr.bf16.mxu0 %v971
      %1279 = vmatpush1.bf16.msra.mxu0 %v970
      %1280 = vmatprep.subr.bf16.mxu0 %v979
      %1281 = vmatpush1.bf16.msra.mxu0 %v978
      %1282 = vmatprep.subr.bf16.mxu0 %v987
      %1283 = vmatpush1.bf16.msra.mxu0 %v986
      %1284 = vmatprep.subr.bf16.mxu0 %v995
      %1285 = vmatpush1.bf16.msra.mxu0 %v994
      %1286 = vmatprep.subr.bf16.mxu0 %v1003
      %1287 = vmatpush1.bf16.msra.mxu0 %v1002
      %1288 = vmatprep.subr.bf16.mxu0 %v1011
      %1289 = vmatpush1.bf16.msra.mxu0 %v1010
      %1290 = vmatprep.subr.bf16.mxu0 %v1019
      %1291 = vmatpush1.bf16.msra.mxu0 %v1018
      %1292 = vmatprep.subr.bf16.mxu0 %v1027
      %1293 = vmatpush1.bf16.msra.mxu0 %v1026
      %1294 = vmatprep.subr.bf16.mxu0 %v1035
      %1295 = vmatpush1.bf16.msra.mxu0 %v1034
      %1296 = vmatprep.subr.bf16.mxu0 %v1043
      %1297 = vmatpush1.bf16.msra.mxu0 %v1042
      %1298 = vmatprep.subr.bf16.mxu0 %v1051
      %1299 = vmatpush1.bf16.msra.mxu0 %v1050
      %1300 = vmatprep.mubr.bf16.mxu0 %v371
      %1301 = vmatmul.mubr.bf16.gmra.mrb[0].mxu0 %v370
      %v1302 = vpop.f32.mrb[0].mxu0
      %v1303 = vadd.f32 %v521, %v1302
      %v1304 = vpop.f32.mrb[0].mxu0
      %v1305 = vadd.f32 %v525, %v1304
      %v1306 = vpop.f32.mrb[0].mxu0
      %v1307 = vadd.f32 %v521, %v1306
      %v1308 = vpop.f32.mrb[0].mxu0
      %v1309 = vadd.f32 %v525, %v1308
      %1310 = vdwg.mxu0
      %1311 = vmatprep.subr.bf16.mxu0 %v933
      %1312 = vmatpush1.bf16.msra.mxu0 %v932
      %1313 = vmatprep.subr.bf16.mxu0 %v941
      %1314 = vmatpush1.bf16.msra.mxu0 %v940
      %1315 = vmatprep.subr.bf16.mxu0 %v949
      %1316 = vmatpush1.bf16.msra.mxu0 %v948
      %1317 = vmatprep.subr.bf16.mxu0 %v957
      %1318 = vmatpush1.bf16.msra.mxu0 %v956
      %1319 = vmatprep.subr.bf16.mxu0 %v965
      %1320 = vmatpush1.bf16.msra.mxu0 %v964
      %1321 = vmatprep.subr.bf16.mxu0 %v973
      %1322 = vmatpush1.bf16.msra.mxu0 %v972
      %1323 = vmatprep.subr.bf16.mxu0 %v981
      %1324 = vmatpush1.bf16.msra.mxu0 %v980
      %1325 = vmatprep.subr.bf16.mxu0 %v989
      %1326 = vmatpush1.bf16.msra.mxu0 %v988
      %1327 = vmatprep.subr.bf16.mxu0 %v997
      %1328 = vmatpush1.bf16.msra.mxu0 %v996
      %1329 = vmatprep.subr.bf16.mxu0 %v1005
      %1330 = vmatpush1.bf16.msra.mxu0 %v1004
      %1331 = vmatprep.subr.bf16.mxu0 %v1013
      %1332 = vmatpush1.bf16.msra.mxu0 %v1012
      %1333 = vmatprep.subr.bf16.mxu0 %v1021
      %1334 = vmatpush1.bf16.msra.mxu0 %v1020
      %1335 = vmatprep.subr.bf16.mxu0 %v1029
      %1336 = vmatpush1.bf16.msra.mxu0 %v1028
      %1337 = vmatprep.subr.bf16.mxu0 %v1037
      %1338 = vmatpush1.bf16.msra.mxu0 %v1036
      %1339 = vmatprep.subr.bf16.mxu0 %v1045
      %1340 = vmatpush1.bf16.msra.mxu0 %v1044
      %1341 = vmatprep.subr.bf16.mxu0 %v1053
      %1342 = vmatpush1.bf16.msra.mxu0 %v1052
      %1343 = vmatprep.mubr.bf16.mxu0 %v371
      %1344 = vmatmul.mubr.bf16.gmra.mrb[0].mxu0 %v370
      %v1345 = vpop.f32.mrb[0].mxu0
      %v1346 = vadd.f32 %v529, %v1345
      %v1347 = vpop.f32.mrb[0].mxu0
      %v1348 = vadd.f32 %v533, %v1347
      %v1349 = vpop.f32.mrb[0].mxu0
      %v1350 = vadd.f32 %v529, %v1349
      %v1351 = vpop.f32.mrb[0].mxu0
      %v1352 = vadd.f32 %v533, %v1351
      %1353 = vdwg.mxu0
      %v1354 = vmax.f32 %v1217, 0.0
      %v1355 = vmax.f32 %v1219, 0.0
      %v1356 = vmax.f32 %v1260, 0.0
      %v1357 = vmax.f32 %v1262, 0.0
      %v1358 = vmax.f32 %v1303, 0.0
      %v1359 = vmax.f32 %v1305, 0.0
      %v1360 = vmax.f32 %v1346, 0.0
      %v1361 = vmax.f32 %v1348, 0.0
      %v1362 = vmax.f32 %v1221, 0.0
      %v1363 = vmax.f32 %v1223, 0.0
      %v1364 = vmax.f32 %v1264, 0.0
      %v1365 = vmax.f32 %v1266, 0.0
      %v1366 = vmax.f32 %v1307, 0.0
      %v1367 = vmax.f32 %v1309, 0.0
      %v1368 = vmax.f32 %v1350, 0.0
      %v1369 = vmax.f32 %v1352, 0.0
      %v1370 = vpack.c.bf16 %v1362, %v1354
      %v1371 = vpack.c.bf16 %v1363, %v1355
      %v1372 = vpack.c.bf16 %v1364, %v1356
      %v1373 = vpack.c.bf16 %v1365, %v1357
      %v1374 = vpack.c.bf16 %v1366, %v1358
      %v1375 = vpack.c.bf16 %v1367, %v1359
      %v1376 = vpack.c.bf16 %v1368, %v1360
      %v1377 = vpack.c.bf16 %v1369, %v1361
      %v1378 = vld [vmem:[%s5] sm:$0xf]
      %v1379 = vld [vmem:[%s5 + $0x4] sm:$0xf]
      %v1380 = vld [vmem:[%s5 + $0x8] sm:$0xf]
      %v1381 = vld [vmem:[%s5 + $0xc] sm:$0xf]
      %v1382 = vld [vmem:[%s5 + $0x10] sm:$0xf]
      %v1383 = vld [vmem:[%s5 + $0x14] sm:$0xf]
      %v1384 = vld [vmem:[%s5 + $0x18] sm:$0xf]
      %v1385 = vld [vmem:[%s5 + $0x1c] sm:$0xf]
      %v1386 = vld [vmem:[%s5 + $0x20] sm:$0xf]
      %v1387 = vld [vmem:[%s5 + $0x24] sm:$0xf]
      %v1388 = vld [vmem:[%s5 + $0x28] sm:$0xf]
      %v1389 = vld [vmem:[%s5 + $0x2c] sm:$0xf]
      %v1390 = vld [vmem:[%s5 + $0x30] sm:$0xf]
      %v1391 = vld [vmem:[%s5 + $0x34] sm:$0xf]
      %v1392 = vld [vmem:[%s5 + $0x38] sm:$0xf]
      %v1393 = vld [vmem:[%s5 + $0x3c] sm:$0xf]
      %v1394 = vld [vmem:[%s5 + $0x40] sm:$0xf]
      %v1395 = vld [vmem:[%s5 + $0x44] sm:$0xf]
      %v1396 = vld [vmem:[%s5 + $0x48] sm:$0xf]
      %v1397 = vld [vmem:[%s5 + $0x4c] sm:$0xf]
      %v1398 = vld [vmem:[%s5 + $0x50] sm:$0xf]
      %v1399 = vld [vmem:[%s5 + $0x54] sm:$0xf]
      %v1400 = vld [vmem:[%s5 + $0x58] sm:$0xf]
      %v1401 = vld [vmem:[%s5 + $0x5c] sm:$0xf]
      %v1402 = vld [vmem:[%s5 + $0x60] sm:$0xf]
      %v1403 = vld [vmem:[%s5 + $0x64] sm:$0xf]
      %v1404 = vld [vmem:[%s5 + $0x68] sm:$0xf]
      %v1405 = vld [vmem:[%s5 + $0x6c] sm:$0xf]
      %v1406 = vld [vmem:[%s5 + $0x70] sm:$0xf]
      %v1407 = vld [vmem:[%s5 + $0x74] sm:$0xf]
      %v1408 = vld [vmem:[%s5 + $0x78] sm:$0xf]
      %v1409 = vld [vmem:[%s5 + $0x7c] sm:$0xf]
      %v1410 = vld [vmem:[%s5 + $0x80] sm:$0xf]
      %v1411 = vld [vmem:[%s5 + $0x84] sm:$0xf]
      %v1412 = vld [vmem:[%s5 + $0x88] sm:$0xf]
      %v1413 = vld [vmem:[%s5 + $0x8c] sm:$0xf]
      %v1414 = vld [vmem:[%s5 + $0x90] sm:$0xf]
      %v1415 = vld [vmem:[%s5 + $0x94] sm:$0xf]
      %v1416 = vld [vmem:[%s5 + $0x98] sm:$0xf]
      %v1417 = vld [vmem:[%s5 + $0x9c] sm:$0xf]
      %v1418 = vld [vmem:[%s5 + $0xa0] sm:$0xf]
      %v1419 = vld [vmem:[%s5 + $0xa4] sm:$0xf]
      %v1420 = vld [vmem:[%s5 + $0xa8] sm:$0xf]
      %v1421 = vld [vmem:[%s5 + $0xac] sm:$0xf]
      %v1422 = vld [vmem:[%s5 + $0xb0] sm:$0xf]
      %v1423 = vld [vmem:[%s5 + $0xb4] sm:$0xf]
      %v1424 = vld [vmem:[%s5 + $0xb8] sm:$0xf]
      %v1425 = vld [vmem:[%s5 + $0xbc] sm:$0xf]
      %v1426 = vld [vmem:[%s5 + $0xc0] sm:$0xf]
      %v1427 = vld [vmem:[%s5 + $0xc4] sm:$0xf]
      %v1428 = vld [vmem:[%s5 + $0xc8] sm:$0xf]
      %v1429 = vld [vmem:[%s5 + $0xcc] sm:$0xf]
      %v1430 = vld [vmem:[%s5 + $0xd0] sm:$0xf]
      %v1431 = vld [vmem:[%s5 + $0xd4] sm:$0xf]
      %v1432 = vld [vmem:[%s5 + $0xd8] sm:$0xf]
      %v1433 = vld [vmem:[%s5 + $0xdc] sm:$0xf]
      %v1434 = vld [vmem:[%s5 + $0xe0] sm:$0xf]
      %v1435 = vld [vmem:[%s5 + $0xe4] sm:$0xf]
      %v1436 = vld [vmem:[%s5 + $0xe8] sm:$0xf]
      %v1437 = vld [vmem:[%s5 + $0xec] sm:$0xf]
      %v1438 = vld [vmem:[%s5 + $0xf0] sm:$0xf]
      %v1439 = vld [vmem:[%s5 + $0xf4] sm:$0xf]
      %v1440 = vld [vmem:[%s5 + $0xf8] sm:$0xf]
      %v1441 = vld [vmem:[%s5 + $0xfc] sm:$0xf]
      %v1442 = vld [vmem:[%s5 + $0x100] sm:$0xf]
      %v1443 = vld [vmem:[%s5 + $0x104] sm:$0xf]
      %v1444 = vld [vmem:[%s5 + $0x108] sm:$0xf]
      %v1445 = vld [vmem:[%s5 + $0x10c] sm:$0xf]
      %v1446 = vld [vmem:[%s5 + $0x110] sm:$0xf]
      %v1447 = vld [vmem:[%s5 + $0x114] sm:$0xf]
      %v1448 = vld [vmem:[%s5 + $0x118] sm:$0xf]
      %v1449 = vld [vmem:[%s5 + $0x11c] sm:$0xf]
      %v1450 = vld [vmem:[%s5 + $0x120] sm:$0xf]
      %v1451 = vld [vmem:[%s5 + $0x124] sm:$0xf]
      %v1452 = vld [vmem:[%s5 + $0x128] sm:$0xf]
      %v1453 = vld [vmem:[%s5 + $0x12c] sm:$0xf]
      %v1454 = vld [vmem:[%s5 + $0x130] sm:$0xf]
      %v1455 = vld [vmem:[%s5 + $0x134] sm:$0xf]
      %v1456 = vld [vmem:[%s5 + $0x138] sm:$0xf]
      %v1457 = vld [vmem:[%s5 + $0x13c] sm:$0xf]
      %v1458 = vld [vmem:[%s5 + $0x140] sm:$0xf]
      %v1459 = vld [vmem:[%s5 + $0x144] sm:$0xf]
      %v1460 = vld [vmem:[%s5 + $0x148] sm:$0xf]
      %v1461 = vld [vmem:[%s5 + $0x14c] sm:$0xf]
      %v1462 = vld [vmem:[%s5 + $0x150] sm:$0xf]
      %v1463 = vld [vmem:[%s5 + $0x154] sm:$0xf]
      %v1464 = vld [vmem:[%s5 + $0x158] sm:$0xf]
      %v1465 = vld [vmem:[%s5 + $0x15c] sm:$0xf]
      %v1466 = vld [vmem:[%s5 + $0x160] sm:$0xf]
      %v1467 = vld [vmem:[%s5 + $0x164] sm:$0xf]
      %v1468 = vld [vmem:[%s5 + $0x168] sm:$0xf]
      %v1469 = vld [vmem:[%s5 + $0x16c] sm:$0xf]
      %v1470 = vld [vmem:[%s5 + $0x170] sm:$0xf]
      %v1471 = vld [vmem:[%s5 + $0x174] sm:$0xf]
      %v1472 = vld [vmem:[%s5 + $0x178] sm:$0xf]
      %v1473 = vld [vmem:[%s5 + $0x17c] sm:$0xf]
      %v1474 = vld [vmem:[%s5 + $0x180] sm:$0xf]
      %v1475 = vld [vmem:[%s5 + $0x184] sm:$0xf]
      %v1476 = vld [vmem:[%s5 + $0x188] sm:$0xf]
      %v1477 = vld [vmem:[%s5 + $0x18c] sm:$0xf]
      %v1478 = vld [vmem:[%s5 + $0x190] sm:$0xf]
      %v1479 = vld [vmem:[%s5 + $0x194] sm:$0xf]
      %v1480 = vld [vmem:[%s5 + $0x198] sm:$0xf]
      %v1481 = vld [vmem:[%s5 + $0x19c] sm:$0xf]
      %v1482 = vld [vmem:[%s5 + $0x1a0] sm:$0xf]
      %v1483 = vld [vmem:[%s5 + $0x1a4] sm:$0xf]
      %v1484 = vld [vmem:[%s5 + $0x1a8] sm:$0xf]
      %v1485 = vld [vmem:[%s5 + $0x1ac] sm:$0xf]
      %v1486 = vld [vmem:[%s5 + $0x1b0] sm:$0xf]
      %v1487 = vld [vmem:[%s5 + $0x1b4] sm:$0xf]
      %v1488 = vld [vmem:[%s5 + $0x1b8] sm:$0xf]
      %v1489 = vld [vmem:[%s5 + $0x1bc] sm:$0xf]
      %v1490 = vld [vmem:[%s5 + $0x1c0] sm:$0xf]
      %v1491 = vld [vmem:[%s5 + $0x1c4] sm:$0xf]
      %v1492 = vld [vmem:[%s5 + $0x1c8] sm:$0xf]
      %v1493 = vld [vmem:[%s5 + $0x1cc] sm:$0xf]
      %v1494 = vld [vmem:[%s5 + $0x1d0] sm:$0xf]
      %v1495 = vld [vmem:[%s5 + $0x1d4] sm:$0xf]
      %v1496 = vld [vmem:[%s5 + $0x1d8] sm:$0xf]
      %v1497 = vld [vmem:[%s5 + $0x1dc] sm:$0xf]
      %v1498 = vld [vmem:[%s5 + $0x1e0] sm:$0xf]
      %v1499 = vld [vmem:[%s5 + $0x1e4] sm:$0xf]
      %v1500 = vld [vmem:[%s5 + $0x1e8] sm:$0xf]
      %v1501 = vld [vmem:[%s5 + $0x1ec] sm:$0xf]
      %v1502 = vld [vmem:[%s5 + $0x1f0] sm:$0xf]
      %v1503 = vld [vmem:[%s5 + $0x1f4] sm:$0xf]
      %v1504 = vld [vmem:[%s5 + $0x1f8] sm:$0xf]
      %v1505 = vld [vmem:[%s5 + $0x1fc] sm:$0xf]
      %s1506 = sld [smem:[#allocation2]]
      %v1507 = vstv %s1506
      %v1636 = vunpack.c.l.b16 %v1378
      %v1637 = vunpack.c.l.b16 %v1379
      %v1638 = vunpack.c.l.b16 %v1380
      %v1639 = vunpack.c.l.b16 %v1381
      %v1640 = vunpack.c.l.b16 %v1382
      %v1641 = vunpack.c.l.b16 %v1383
      %v1642 = vunpack.c.l.b16 %v1384
      %v1643 = vunpack.c.l.b16 %v1385
      %v1644 = vunpack.c.l.b16 %v1386
      %v1645 = vunpack.c.l.b16 %v1387
      %v1646 = vunpack.c.l.b16 %v1388
      %v1647 = vunpack.c.l.b16 %v1389
      %v1648 = vunpack.c.l.b16 %v1390
      %v1649 = vunpack.c.l.b16 %v1391
      %v1650 = vunpack.c.l.b16 %v1392
      %v1651 = vunpack.c.l.b16 %v1393
      %v1652 = vunpack.c.l.b16 %v1394
      %v1653 = vunpack.c.l.b16 %v1395
      %v1654 = vunpack.c.l.b16 %v1396
      %v1655 = vunpack.c.l.b16 %v1397
      %v1656 = vunpack.c.l.b16 %v1398
      %v1657 = vunpack.c.l.b16 %v1399
      %v1658 = vunpack.c.l.b16 %v1400
      %v1659 = vunpack.c.l.b16 %v1401
      %v1660 = vunpack.c.l.b16 %v1402
      %v1661 = vunpack.c.l.b16 %v1403
      %v1662 = vunpack.c.l.b16 %v1404
      %v1663 = vunpack.c.l.b16 %v1405
      %v1664 = vunpack.c.l.b16 %v1406
      %v1665 = vunpack.c.l.b16 %v1407
      %v1666 = vunpack.c.l.b16 %v1408
      %v1667 = vunpack.c.l.b16 %v1409
      %v1668 = vunpack.c.l.b16 %v1410
      %v1669 = vunpack.c.l.b16 %v1411
      %v1670 = vunpack.c.l.b16 %v1412
      %v1671 = vunpack.c.l.b16 %v1413
      %v1672 = vunpack.c.l.b16 %v1414
      %v1673 = vunpack.c.l.b16 %v1415
      %v1674 = vunpack.c.l.b16 %v1416
      %v1675 = vunpack.c.l.b16 %v1417
      %v1676 = vunpack.c.l.b16 %v1418
      %v1677 = vunpack.c.l.b16 %v1419
      %v1678 = vunpack.c.l.b16 %v1420
      %v1679 = vunpack.c.l.b16 %v1421
      %v1680 = vunpack.c.l.b16 %v1422
      %v1681 = vunpack.c.l.b16 %v1423
      %v1682 = vunpack.c.l.b16 %v1424
      %v1683 = vunpack.c.l.b16 %v1425
      %v1684 = vunpack.c.l.b16 %v1426
      %v1685 = vunpack.c.l.b16 %v1427
      %v1686 = vunpack.c.l.b16 %v1428
      %v1687 = vunpack.c.l.b16 %v1429
      %v1688 = vunpack.c.l.b16 %v1430
      %v1689 = vunpack.c.l.b16 %v1431
      %v1690 = vunpack.c.l.b16 %v1432
      %v1691 = vunpack.c.l.b16 %v1433
      %v1692 = vunpack.c.l.b16 %v1434
      %v1693 = vunpack.c.l.b16 %v1435
      %v1694 = vunpack.c.l.b16 %v1436
      %v1695 = vunpack.c.l.b16 %v1437
      %v1696 = vunpack.c.l.b16 %v1438
      %v1697 = vunpack.c.l.b16 %v1439
      %v1698 = vunpack.c.l.b16 %v1440
      %v1699 = vunpack.c.l.b16 %v1441
      %v1700 = vunpack.c.l.b16 %v1442
      %v1701 = vunpack.c.l.b16 %v1443
      %v1702 = vunpack.c.l.b16 %v1444
      %v1703 = vunpack.c.l.b16 %v1445
      %v1704 = vunpack.c.l.b16 %v1446
      %v1705 = vunpack.c.l.b16 %v1447
      %v1706 = vunpack.c.l.b16 %v1448
      %v1707 = vunpack.c.l.b16 %v1449
      %v1708 = vunpack.c.l.b16 %v1450
      %v1709 = vunpack.c.l.b16 %v1451
      %v1710 = vunpack.c.l.b16 %v1452
      %v1711 = vunpack.c.l.b16 %v1453
      %v1712 = vunpack.c.l.b16 %v1454
      %v1713 = vunpack.c.l.b16 %v1455
      %v1714 = vunpack.c.l.b16 %v1456
      %v1715 = vunpack.c.l.b16 %v1457
      %v1716 = vunpack.c.l.b16 %v1458
      %v1717 = vunpack.c.l.b16 %v1459
      %v1718 = vunpack.c.l.b16 %v1460
      %v1719 = vunpack.c.l.b16 %v1461
      %v1720 = vunpack.c.l.b16 %v1462
      %v1721 = vunpack.c.l.b16 %v1463
      %v1722 = vunpack.c.l.b16 %v1464
      %v1723 = vunpack.c.l.b16 %v1465
      %v1724 = vunpack.c.l.b16 %v1466
      %v1725 = vunpack.c.l.b16 %v1467
      %v1726 = vunpack.c.l.b16 %v1468
      %v1727 = vunpack.c.l.b16 %v1469
      %v1728 = vunpack.c.l.b16 %v1470
      %v1729 = vunpack.c.l.b16 %v1471
      %v1730 = vunpack.c.l.b16 %v1472
      %v1731 = vunpack.c.l.b16 %v1473
      %v1732 = vunpack.c.l.b16 %v1474
      %v1733 = vunpack.c.l.b16 %v1475
      %v1734 = vunpack.c.l.b16 %v1476
      %v1735 = vunpack.c.l.b16 %v1477
      %v1736 = vunpack.c.l.b16 %v1478
      %v1737 = vunpack.c.l.b16 %v1479
      %v1738 = vunpack.c.l.b16 %v1480
      %v1739 = vunpack.c.l.b16 %v1481
      %v1740 = vunpack.c.l.b16 %v1482
      %v1741 = vunpack.c.l.b16 %v1483
      %v1742 = vunpack.c.l.b16 %v1484
      %v1743 = vunpack.c.l.b16 %v1485
      %v1744 = vunpack.c.l.b16 %v1486
      %v1745 = vunpack.c.l.b16 %v1487
      %v1746 = vunpack.c.l.b16 %v1488
      %v1747 = vunpack.c.l.b16 %v1489
      %v1748 = vunpack.c.l.b16 %v1490
      %v1749 = vunpack.c.l.b16 %v1491
      %v1750 = vunpack.c.l.b16 %v1492
      %v1751 = vunpack.c.l.b16 %v1493
      %v1752 = vunpack.c.l.b16 %v1494
      %v1753 = vunpack.c.l.b16 %v1495
      %v1754 = vunpack.c.l.b16 %v1496
      %v1755 = vunpack.c.l.b16 %v1497
      %v1756 = vunpack.c.l.b16 %v1498
      %v1757 = vunpack.c.l.b16 %v1499
      %v1758 = vunpack.c.l.b16 %v1500
      %v1759 = vunpack.c.l.b16 %v1501
      %v1760 = vunpack.c.l.b16 %v1502
      %v1761 = vunpack.c.l.b16 %v1503
      %v1762 = vunpack.c.l.b16 %v1504
      %v1763 = vunpack.c.l.b16 %v1505
      %v1764 = vpack.c.b16 %v1637, %v1636
      %v1765 = vpack.c.b16 %v1639, %v1638
      %v1766 = vpack.c.b16 %v1641, %v1640
      %v1767 = vpack.c.b16 %v1643, %v1642
      %v1768 = vpack.c.b16 %v1645, %v1644
      %v1769 = vpack.c.b16 %v1647, %v1646
      %v1770 = vpack.c.b16 %v1649, %v1648
      %v1771 = vpack.c.b16 %v1651, %v1650
      %v1772 = vpack.c.b16 %v1653, %v1652
      %v1773 = vpack.c.b16 %v1655, %v1654
      %v1774 = vpack.c.b16 %v1657, %v1656
      %v1775 = vpack.c.b16 %v1659, %v1658
      %v1776 = vpack.c.b16 %v1661, %v1660
      %v1777 = vpack.c.b16 %v1663, %v1662
      %v1778 = vpack.c.b16 %v1665, %v1664
      %v1779 = vpack.c.b16 %v1667, %v1666
      %v1780 = vpack.c.b16 %v1669, %v1668
      %v1781 = vpack.c.b16 %v1671, %v1670
      %v1782 = vpack.c.b16 %v1673, %v1672
      %v1783 = vpack.c.b16 %v1675, %v1674
      %v1784 = vpack.c.b16 %v1677, %v1676
      %v1785 = vpack.c.b16 %v1679, %v1678
      %v1786 = vpack.c.b16 %v1681, %v1680
      %v1787 = vpack.c.b16 %v1683, %v1682
      %v1788 = vpack.c.b16 %v1685, %v1684
      %v1789 = vpack.c.b16 %v1687, %v1686
      %v1790 = vpack.c.b16 %v1689, %v1688
      %v1791 = vpack.c.b16 %v1691, %v1690
      %v1792 = vpack.c.b16 %v1693, %v1692
      %v1793 = vpack.c.b16 %v1695, %v1694
      %v1794 = vpack.c.b16 %v1697, %v1696
      %v1795 = vpack.c.b16 %v1699, %v1698
      %v1796 = vpack.c.b16 %v1701, %v1700
      %v1797 = vpack.c.b16 %v1703, %v1702
      %v1798 = vpack.c.b16 %v1705, %v1704
      %v1799 = vpack.c.b16 %v1707, %v1706
      %v1800 = vpack.c.b16 %v1709, %v1708
      %v1801 = vpack.c.b16 %v1711, %v1710
      %v1802 = vpack.c.b16 %v1713, %v1712
      %v1803 = vpack.c.b16 %v1715, %v1714
      %v1804 = vpack.c.b16 %v1717, %v1716
      %v1805 = vpack.c.b16 %v1719, %v1718
      %v1806 = vpack.c.b16 %v1721, %v1720
      %v1807 = vpack.c.b16 %v1723, %v1722
      %v1808 = vpack.c.b16 %v1725, %v1724
      %v1809 = vpack.c.b16 %v1727, %v1726
      %v1810 = vpack.c.b16 %v1729, %v1728
      %v1811 = vpack.c.b16 %v1731, %v1730
      %v1812 = vpack.c.b16 %v1733, %v1732
      %v1813 = vpack.c.b16 %v1735, %v1734
      %v1814 = vpack.c.b16 %v1737, %v1736
      %v1815 = vpack.c.b16 %v1739, %v1738
      %v1816 = vpack.c.b16 %v1741, %v1740
      %v1817 = vpack.c.b16 %v1743, %v1742
      %v1818 = vpack.c.b16 %v1745, %v1744
      %v1819 = vpack.c.b16 %v1747, %v1746
      %v1820 = vpack.c.b16 %v1749, %v1748
      %v1821 = vpack.c.b16 %v1751, %v1750
      %v1822 = vpack.c.b16 %v1753, %v1752
      %v1823 = vpack.c.b16 %v1755, %v1754
      %v1824 = vpack.c.b16 %v1757, %v1756
      %v1825 = vpack.c.b16 %v1759, %v1758
      %v1826 = vpack.c.b16 %v1761, %v1760
      %v1827 = vpack.c.b16 %v1763, %v1762
      %1892 = vmatprep.subr.bf16.mxu0 0
      %1893 = vmatpush1.bf16.msra.mxu0 %v1764
      %1894 = vmatprep.subr.bf16.mxu0 0
      %1895 = vmatpush1.bf16.msra.mxu0 %v1765
      %1896 = vmatprep.subr.bf16.mxu0 0
      %1897 = vmatpush1.bf16.msra.mxu0 %v1766
      %1898 = vmatprep.subr.bf16.mxu0 0
      %1899 = vmatpush1.bf16.msra.mxu0 %v1767
      %1900 = vmatprep.subr.bf16.mxu0 0
      %1901 = vmatpush1.bf16.msra.mxu0 %v1768
      %1902 = vmatprep.subr.bf16.mxu0 0
      %1903 = vmatpush1.bf16.msra.mxu0 %v1769
      %1904 = vmatprep.subr.bf16.mxu0 0
      %1905 = vmatpush1.bf16.msra.mxu0 %v1770
      %1906 = vmatprep.subr.bf16.mxu0 0
      %1907 = vmatpush1.bf16.msra.mxu0 %v1771
      %1908 = vmatprep.subr.bf16.mxu0 0
      %1909 = vmatpush1.bf16.msra.mxu0 %v1772
      %1910 = vmatprep.subr.bf16.mxu0 0
      %1911 = vmatpush1.bf16.msra.mxu0 %v1773
      %1912 = vmatprep.subr.bf16.mxu0 0
      %1913 = vmatpush1.bf16.msra.mxu0 %v1774
      %1914 = vmatprep.subr.bf16.mxu0 0
      %1915 = vmatpush1.bf16.msra.mxu0 %v1775
      %1916 = vmatprep.subr.bf16.mxu0 0
      %1917 = vmatpush1.bf16.msra.mxu0 %v1776
      %1918 = vmatprep.subr.bf16.mxu0 0
      %1919 = vmatpush1.bf16.msra.mxu0 %v1777
      %1920 = vmatprep.subr.bf16.mxu0 0
      %1921 = vmatpush1.bf16.msra.mxu0 %v1778
      %1922 = vmatprep.subr.bf16.mxu0 0
      %1923 = vmatpush1.bf16.msra.mxu0 %v1779
      %1924 = vmatprep.mubr.bf16.mxu0 %v1371
      %1925 = vmatmul.mubr.bf16.gmra.mrb[0].mxu0 %v1370
      %v1926 = vpop.f32.mrb[0].mxu0
      %v1927 = vadd.f32 %v1507, %v1926
      %v1928 = vpop.f32.mrb[0].mxu0
      %v1929 = vpop.f32.mrb[0].mxu0
      %v1930 = vadd.f32 %v1507, %v1929
      %v1931 = vpop.f32.mrb[0].mxu0
      %1932 = vdwg.mxu0
      %1933 = vmatprep.subr.bf16.mxu0 0
      %1934 = vmatpush1.bf16.msra.mxu0 %v1780
      %1935 = vmatprep.subr.bf16.mxu0 0
      %1936 = vmatpush1.bf16.msra.mxu0 %v1781
      %1937 = vmatprep.subr.bf16.mxu0 0
      %1938 = vmatpush1.bf16.msra.mxu0 %v1782
      %1939 = vmatprep.subr.bf16.mxu0 0
      %1940 = vmatpush1.bf16.msra.mxu0 %v1783
      %1941 = vmatprep.subr.bf16.mxu0 0
      %1942 = vmatpush1.bf16.msra.mxu0 %v1784
      %1943 = vmatprep.subr.bf16.mxu0 0
      %1944 = vmatpush1.bf16.msra.mxu0 %v1785
      %1945 = vmatprep.subr.bf16.mxu0 0
      %1946 = vmatpush1.bf16.msra.mxu0 %v1786
      %1947 = vmatprep.subr.bf16.mxu0 0
      %1948 = vmatpush1.bf16.msra.mxu0 %v1787
      %1949 = vmatprep.subr.bf16.mxu0 0
      %1950 = vmatpush1.bf16.msra.mxu0 %v1788
      %1951 = vmatprep.subr.bf16.mxu0 0
      %1952 = vmatpush1.bf16.msra.mxu0 %v1789
      %1953 = vmatprep.subr.bf16.mxu0 0
      %1954 = vmatpush1.bf16.msra.mxu0 %v1790
      %1955 = vmatprep.subr.bf16.mxu0 0
      %1956 = vmatpush1.bf16.msra.mxu0 %v1791
      %1957 = vmatprep.subr.bf16.mxu0 0
      %1958 = vmatpush1.bf16.msra.mxu0 %v1792
      %1959 = vmatprep.subr.bf16.mxu0 0
      %1960 = vmatpush1.bf16.msra.mxu0 %v1793
      %1961 = vmatprep.subr.bf16.mxu0 0
      %1962 = vmatpush1.bf16.msra.mxu0 %v1794
      %1963 = vmatprep.subr.bf16.mxu0 0
      %1964 = vmatpush1.bf16.msra.mxu0 %v1795
      %1965 = vmatprep.mubr.bf16.mxu0 %v1373
      %1966 = vmatmul.mubr.bf16.gmra.mrb[0].mxu0 %v1372
      %v1967 = vpop.f32.mrb[0].mxu0
      %v1968 = vadd.f32 %v1927, %v1967
      %v1969 = vpop.f32.mrb[0].mxu0
      %v1970 = vpop.f32.mrb[0].mxu0
      %v1971 = vadd.f32 %v1930, %v1970
      %v1972 = vpop.f32.mrb[0].mxu0
      %1973 = vdwg.mxu0
      %1974 = vmatprep.subr.bf16.mxu0 0
      %1975 = vmatpush1.bf16.msra.mxu0 %v1796
      %1976 = vmatprep.subr.bf16.mxu0 0
      %1977 = vmatpush1.bf16.msra.mxu0 %v1797
      %1978 = vmatprep.subr.bf16.mxu0 0
      %1979 = vmatpush1.bf16.msra.mxu0 %v1798
      %1980 = vmatprep.subr.bf16.mxu0 0
      %1981 = vmatpush1.bf16.msra.mxu0 %v1799
      %1982 = vmatprep.subr.bf16.mxu0 0
      %1983 = vmatpush1.bf16.msra.mxu0 %v1800
      %1984 = vmatprep.subr.bf16.mxu0 0
      %1985 = vmatpush1.bf16.msra.mxu0 %v1801
      %1986 = vmatprep.subr.bf16.mxu0 0
      %1987 = vmatpush1.bf16.msra.mxu0 %v1802
      %1988 = vmatprep.subr.bf16.mxu0 0
      %1989 = vmatpush1.bf16.msra.mxu0 %v1803
      %1990 = vmatprep.subr.bf16.mxu0 0
      %1991 = vmatpush1.bf16.msra.mxu0 %v1804
      %1992 = vmatprep.subr.bf16.mxu0 0
      %1993 = vmatpush1.bf16.msra.mxu0 %v1805
      %1994 = vmatprep.subr.bf16.mxu0 0
      %1995 = vmatpush1.bf16.msra.mxu0 %v1806
      %1996 = vmatprep.subr.bf16.mxu0 0
      %1997 = vmatpush1.bf16.msra.mxu0 %v1807
      %1998 = vmatprep.subr.bf16.mxu0 0
      %1999 = vmatpush1.bf16.msra.mxu0 %v1808
      %2000 = vmatprep.subr.bf16.mxu0 0
      %2001 = vmatpush1.bf16.msra.mxu0 %v1809
      %2002 = vmatprep.subr.bf16.mxu0 0
      %2003 = vmatpush1.bf16.msra.mxu0 %v1810
      %2004 = vmatprep.subr.bf16.mxu0 0
      %2005 = vmatpush1.bf16.msra.mxu0 %v1811
      %2006 = vmatprep.mubr.bf16.mxu0 %v1375
      %2007 = vmatmul.mubr.bf16.gmra.mrb[0].mxu0 %v1374
      %v2008 = vpop.f32.mrb[0].mxu0
      %v2009 = vadd.f32 %v1968, %v2008
      %v2010 = vpop.f32.mrb[0].mxu0
      %v2011 = vpop.f32.mrb[0].mxu0
      %v2012 = vadd.f32 %v1971, %v2011
      %v2013 = vpop.f32.mrb[0].mxu0
      %2014 = vdwg.mxu0
      %2015 = vmatprep.subr.bf16.mxu0 0
      %2016 = vmatpush1.bf16.msra.mxu0 %v1812
      %2017 = vmatprep.subr.bf16.mxu0 0
      %2018 = vmatpush1.bf16.msra.mxu0 %v1813
      %2019 = vmatprep.subr.bf16.mxu0 0
      %2020 = vmatpush1.bf16.msra.mxu0 %v1814
      %2021 = vmatprep.subr.bf16.mxu0 0
      %2022 = vmatpush1.bf16.msra.mxu0 %v1815
      %2023 = vmatprep.subr.bf16.mxu0 0
      %2024 = vmatpush1.bf16.msra.mxu0 %v1816
      %2025 = vmatprep.subr.bf16.mxu0 0
      %2026 = vmatpush1.bf16.msra.mxu0 %v1817
      %2027 = vmatprep.subr.bf16.mxu0 0
      %2028 = vmatpush1.bf16.msra.mxu0 %v1818
      %2029 = vmatprep.subr.bf16.mxu0 0
      %2030 = vmatpush1.bf16.msra.mxu0 %v1819
      %2031 = vmatprep.subr.bf16.mxu0 0
      %2032 = vmatpush1.bf16.msra.mxu0 %v1820
      %2033 = vmatprep.subr.bf16.mxu0 0
      %2034 = vmatpush1.bf16.msra.mxu0 %v1821
      %2035 = vmatprep.subr.bf16.mxu0 0
      %2036 = vmatpush1.bf16.msra.mxu0 %v1822
      %2037 = vmatprep.subr.bf16.mxu0 0
      %2038 = vmatpush1.bf16.msra.mxu0 %v1823
      %2039 = vmatprep.subr.bf16.mxu0 0
      %2040 = vmatpush1.bf16.msra.mxu0 %v1824
      %2041 = vmatprep.subr.bf16.mxu0 0
      %2042 = vmatpush1.bf16.msra.mxu0 %v1825
      %2043 = vmatprep.subr.bf16.mxu0 0
      %2044 = vmatpush1.bf16.msra.mxu0 %v1826
      %2045 = vmatprep.subr.bf16.mxu0 0
      %2046 = vmatpush1.bf16.msra.mxu0 %v1827
      %2047 = vmatprep.mubr.bf16.mxu0 %v1377
      %2048 = vmatmul.mubr.bf16.gmra.mrb[0].mxu0 %v1376
      %v2049 = vpop.f32.mrb[0].mxu0
      %v2050 = vadd.f32 %v2009, %v2049
      %v2051 = vpop.f32.mrb[0].mxu0
      %v2052 = vpop.f32.mrb[0].mxu0
      %v2053 = vadd.f32 %v2012, %v2052
      %v2054 = vpop.f32.mrb[0].mxu0
      %2055 = vdwg.mxu0
      %v2056 = vsub.f32 0.0, %v2050
      %v2057 = vsub.f32 0.0, %v2053
      %v2058 = vmul.f32 %v2056, 1.442695
      %v2059 = vpow.pop %v2058
      %v2060 = vmul.f32 %v2057, 1.442695
      %v2061 = vpow.pop %v2060
      %v2062 = vadd.f32 %v2059, 1.0
      %v2063 = vadd.f32 %v2061, 1.0
      %v2064 = vrcp.pop %v2062
      %v2065 = vrcp.pop %v2063
      %v2066 = vpack.c.bf16 %v2065, %v2064
      %v2067 = vld [vmem:[%s6] sm:$0xff]
      %v2068 = vld [vmem:[%s6 + $0x8] sm:$0xff]
      %v2071 = vunpack.c.l.b16 %v2067
      %v2072 = vunpack.c.h.b16 %v2067
      %v2073 = vunpack.c.l.b16 %v2068
      %v2074 = vunpack.c.h.b16 %v2068
      %v2075 = vpack.c.b16 %v2073, %v2071
      %v2076 = vpack.c.b16 %v2074, %v2072
      %vm2079 = vcmask 130048
      %v2081 = vsel %vm2079, %v2066, 0
      %2083 = vmatprep.subr.bf16.mxu0 %v2076
      %2084 = vmatpush1.bf16.msra.mxu0 %v2075
      %2085 = vmatprep.subr.bf16.mxu0 0
      %2086 = vmatpush1.bf16.msra.mxu0 0
      %2087 = vmatprep.subr.bf16.mxu0 0
      %2088 = vmatpush1.bf16.msra.mxu0 0
      %2089 = vmatprep.subr.bf16.mxu0 0
      %2090 = vmatpush1.bf16.msra.mxu0 0
      %2091 = vmatprep.subr.bf16.mxu0 0
      %2092 = vmatpush1.bf16.msra.mxu0 0
      %2093 = vmatprep.subr.bf16.mxu0 0
      %2094 = vmatpush1.bf16.msra.mxu0 0
      %2095 = vmatprep.subr.bf16.mxu0 0
      %2096 = vmatpush1.bf16.msra.mxu0 0
      %2097 = vmatprep.subr.bf16.mxu0 0
      %2098 = vmatpush1.bf16.msra.mxu0 0
      %2099 = vmatprep.subr.bf16.mxu0 0
      %2100 = vmatpush1.bf16.msra.mxu0 0
      %2101 = vmatprep.subr.bf16.mxu0 0
      %2102 = vmatpush1.bf16.msra.mxu0 0
      %2103 = vmatprep.subr.bf16.mxu0 0
      %2104 = vmatpush1.bf16.msra.mxu0 0
      %2105 = vmatprep.subr.bf16.mxu0 0
      %2106 = vmatpush1.bf16.msra.mxu0 0
      %2107 = vmatprep.subr.bf16.mxu0 0
      %2108 = vmatpush1.bf16.msra.mxu0 0
      %2109 = vmatprep.subr.bf16.mxu0 0
      %2110 = vmatpush1.bf16.msra.mxu0 0
      %2111 = vmatprep.subr.bf16.mxu0 0
      %2112 = vmatpush1.bf16.msra.mxu0 0
      %2113 = vmatprep.subr.bf16.mxu0 0
      %2114 = vmatpush1.bf16.msra.mxu0 0
      %2115 = vmatprep.mubr.bf16.mxu0 0
      %2116 = vmatmul.mubr.bf16.gmra.mrb[0].mxu0 %v2081
      %v2117 = vpop.f32.mrb[0].mxu0
      %v2118 = vadd.f32 0.0, %v2117
      %v2119 = vpop.f32.mrb[0].mxu0
      %v2120 = vadd.f32 0.0, %v2119
      %v2121 = vpop.f32.mrb[0].mxu0
      %v2122 = vadd.f32 0.0, %v2121
      %v2123 = vpop.f32.mrb[0].mxu0
      %v2124 = vadd.f32 0.0, %v2123
      %2125 = vdwg.mxu0
      %v2126 = vld [vmem:[%s356] sm:$0xff]
      %v2127 = vld [vmem:[%s356 + $0x8] sm:$0xff]
      %v2128 = vld [vmem:[%s356 + $0x10] sm:$0xff]
      %v2129 = vld [vmem:[%s356 + $0x18] sm:$0xff]
      %v2130 = vld [vmem:[%s349] sm:$0xff]
      %v2131 = vld [vmem:[%s349 + $0x8] sm:$0xff]
      %v2132 = vld [vmem:[%s349 + $0x10] sm:$0xff]
      %v2133 = vld [vmem:[%s349 + $0x18] sm:$0xff]
      %v2134 = vsub.f32 %v2130, %v2126
      %v2135 = vsub.f32 %v2131, %v2127
      %v2136 = vsub.f32 %v2132, %v2128
      %v2137 = vsub.f32 %v2133, %v2129
      %v2138 = vmul.f32 %v2118, %v2134
      %v2139 = vmul.f32 %v2120, %v2135
      %v2140 = vmul.f32 %v2122, %v2136
      %v2141 = vmul.f32 %v2124, %v2137
      %v2142 = vadd.f32 %v2126, %v2138
      %v2143 = vadd.f32 %v2127, %v2139
      %v2144 = vadd.f32 %v2128, %v2140
      %v2145 = vadd.f32 %v2129, %v2141
      %2146 = vst [vmem:[%s363] sm:$0xff] %v2142
      %2147 = vst [vmem:[%s363 + $0x8] sm:$0xff] %v2143
      %2148 = vst [vmem:[%s363 + $0x10] sm:$0xff] %v2144
      %2149 = vst [vmem:[%s363 + $0x18] sm:$0xff] %v2145
      %s2150 = smul.u32 2, %s20
      %p2151 = scmp.lt.s32.totalorder %s2150, 3
      %s2152 = scalar_select %p2151, %s2150, 3
      %s2153 = smul.addr %s2152, 2
      %s2154 = smul.addr %s2153, 8
      %s2155 = scalar_lea.vmem %s8, %s2154
      // Predicated region
      $region53: #{adaptive_gate_forward.1} parent=51 // pred_check
        %p2156 = pneg %p221
      $region54: #{adaptive_gate_forward.1} parent=51 // pred_check_branch
        %2158 = sbr.rel (%p2156) target = $region56
      $region55: #{adaptive_gate_forward.1} parent=51 // pred_region
        %s2159 = smul.u32 2, %s20
      $region56: #{adaptive_gate_forward.1} parent=51 // pred_fallthru
        _
    $region52: #{adaptive_gate_forward.1} parent=5 // pred_fallthru
      _
    %p2160 = scmp.le.s32.totalorder 2, %s15
    // Predicated region
    $region57: #{adaptive_gate_forward.1} parent=5 // pred_check
      %p2161 = pneg %p2160
    $region58: #{adaptive_gate_forward.1} parent=5 // pred_check_branch
      %2163 = sbr.rel (%p2161) target = $region60
    $region59: #{adaptive_gate_forward.1} parent=5 // pred_region
      %s2164 = ssub.s32 %s15, 2
      // Predicated region
      $region61: #{adaptive_gate_forward.1} parent=59 // pred_check
        %p2165 = pneg %p227
      $region62: #{adaptive_gate_forward.1} parent=59 // pred_check_branch
        %2167 = sbr.rel (%p2165) target = $region64
      $region63: #{adaptive_gate_forward.1} parent=59 // pred_region
        %s2168 = smul.u32 2, %s21
        %p2169 = scmp.lt.s32.totalorder %s2168, 3
        %s2170 = scalar_select %p2169, %s2168, 3
        %s2171 = smul.addr %s2170, 2
        %s2172 = smul.addr %s2171, 8
        %s2173 = scalar_lea.vmem %s8, %s2172
      $region64: #{adaptive_gate_forward.1} parent=59 // pred_fallthru
        _
    $region60: #{adaptive_gate_forward.1} parent=5 // pred_fallthru
      _
  $region6: #{adaptive_gate_forward.1} parent=0 // loop_footer
    %s19 = sadd.s32 1, %s15
  $region7: #{adaptive_gate_forward.1} parent=0 // loop_footer_branch
    %14 = sbr.rel target = $region3
  $region8: #{adaptive_gate_forward.1} parent=0 // loop_exit
    _

</llo_original>
